<compile_context>
chip_gen: v7x
topology: tpu7x:2x2x1
jax: 0.10.0
libtpu: 0.0.40
codegen_flags: <defaults>
</compile_context>

<pallas_src>
import jax
import jax.numpy as jnp
from jax.experimental import pallas as pl
from jax.experimental.pallas import tpu as pltpu


def get_box_encoding_len(box_encoding_method):
    # PointGNN box encodings are 7-parameter boxes (x, y, z, l, h, w, yaw).
    return {
        "classaware_all_class_box_encoding": 7,
        "classaware_all_class_box_canonical_encoding": 7,
        "absolute_box_encoding": 7,
    }.get(box_encoding_method, 7)


def _round_up(x, m):
    return (x + m - 1) // m * m


# ----------------------------- Pallas kernel --------------------------------

def _make_kernel(n_cls_mid, n_box_mid, cls_h1_pad):
    """Fused kernel for one row tile.

    Ref order: x, W1, b1, [cls mid (W,b)]*, [box mid block-diag (W,b)]*,
               Wcls_final, Wbox_final, b_out, out_ref.
    """

    def kernel(*refs):
        x = refs[0][...]                                   # [tn, d_in] f32
        w1 = refs[1][...]                                  # [d_in, D1]
        b1 = refs[2][...]                                  # [1, D1]

        # Fused first layer: cls hidden (lanes [0:128)) + all per-class box
        # hiddens (lanes [128:D1)), one big MXU pass, one read of x.
        h1 = jnp.maximum(
            jnp.dot(x, w1, preferred_element_type=jnp.float32) + b1, 0.0)
        hc = h1[:, :cls_h1_pad]                            # [tn, 128]
        hb = h1[:, cls_h1_pad:]                            # [tn, C*box_h1]

        pos = 3
        for _ in range(n_cls_mid):                         # cls hidden layers
            w = refs[pos][...]
            b = refs[pos + 1][...]
            pos += 2
            hc = jnp.maximum(
                jnp.dot(hc, w, preferred_element_type=jnp.float32) + b, 0.0)

        for _ in range(n_box_mid):                         # box hidden layers
            w = refs[pos][...]                             # block-diagonal
            b = refs[pos + 1][...]
            pos += 2
            hb = jnp.maximum(
                jnp.dot(hb, w, preferred_element_type=jnp.float32) + b, 0.0)

        wcf = refs[pos][...]                               # [.,  out_pad] logits cols
        wbf = refs[pos + 1][...]                           # [.,  out_pad] box cols
        bout = refs[pos + 2][...]                          # [1,  out_pad]
        out_ref = refs[pos + 3]

        # Combined final layer: logits land in cols [0:num_classes), the
        # class-concatenated box encodings in the following cols; the rest of
        # the 128-lane slab is zero.  One dense (unmasked) store.
        out_ref[...] = (jnp.dot(hc, wcf, preferred_element_type=jnp.float32)
                        + jnp.dot(hb, wbf, preferred_element_type=jnp.float32)
                        + bout)

    return kernel


# ------------------------------ wrapper --------------------------------------

def class_aware_predictor(x, cls_params, box_params, *, tile_n=1024):
    """Fused ClassAwarePredictor forward.

    x:          [N, D_in] float32
    cls_params: list of (W [din, dout], b [1, dout])            -- cls MLP
    box_params: list of (W [C, din, dout], b [C, 1, dout])      -- stacked per-class box MLPs
    returns (logits [N, num_classes], box_encodings [N, C * box_encoding_len])
    """
    f32 = jnp.float32
    x = x.astype(f32)
    N, d_in = x.shape
    num_classes = cls_params[-1][0].shape[-1]
    box_len = box_params[-1][0].shape[-1]
    C = num_classes
    L_c = len(cls_params)
    L_b = len(box_params)
    # TODO(synk): depth-1 (single Linear) MLP configs are not supported by the
    # fused-first-layer packing; PointGNN configs always have >= 2 layers.
    assert L_c >= 2 and L_b >= 2, "fused packing assumes >=2 layers per MLP"

    cls_h1 = cls_params[0][0].shape[-1]
    box_h1 = box_params[0][0].shape[-1]
    cls_h1_pad = _round_up(cls_h1, 128)        # aligned lane split for slicing
    D1 = cls_h1_pad + C * box_h1

    # ---- fused first layer: [cls W1 | zero pad | column-stacked box W1] ----
    W1 = jnp.zeros((d_in, D1), f32)
    W1 = W1.at[:, :cls_h1].set(cls_params[0][0].astype(f32))
    W1 = W1.at[:, cls_h1_pad:].set(
        jnp.transpose(box_params[0][0], (1, 0, 2))
        .reshape(d_in, C * box_h1).astype(f32))
    b1 = jnp.zeros((1, D1), f32)
    b1 = b1.at[:, :cls_h1].set(cls_params[0][1].reshape(1, cls_h1).astype(f32))
    b1 = b1.at[:, cls_h1_pad:].set(
        box_params[0][1].reshape(1, C * box_h1).astype(f32))

    # ---- cls mid layers (ReLU); input rows padded to the running width ----
    cls_mid = []
    prev_c = cls_h1_pad
    for (w, b) in cls_params[1:-1]:
        hin, hout = w.shape
        wp = jnp.zeros((prev_c, hout), f32).at[:hin, :].set(w.astype(f32))
        cls_mid.append((wp, b.reshape(1, hout).astype(f32)))
        prev_c = hout

    # ---- box mid layers: block-diagonal stacked weights (ReLU) ----
    def block_diag(w):  # [C, hin, hout] -> [C*hin, C*hout]
        Cc, hin, hout = w.shape
        bd = jnp.zeros((Cc * hin, Cc * hout), f32)
        for c in range(Cc):
            bd = bd.at[c * hin:(c + 1) * hin,
                       c * hout:(c + 1) * hout].set(w[c].astype(f32))
        return bd

    box_mid = []
    prev_b = C * box_h1
    for (w, b) in box_params[1:-1]:
        _, hin, hout = w.shape
        box_mid.append((block_diag(w), b.reshape(1, C * hout).astype(f32)))
        prev_b = C * hout

    # ---- fused final layer into one lane-dense output slab ----
    out_width = num_classes + C * box_len
    out_pad = _round_up(out_width, 128)

    wc, bc = cls_params[-1]
    cls_last_in = wc.shape[0]
    Wcf = (jnp.zeros((prev_c, out_pad), f32)
           .at[:cls_last_in, :num_classes].set(wc.astype(f32)))

    wb, bb = box_params[-1]
    box_last_in = wb.shape[1]
    Wbf = jnp.zeros((prev_b, out_pad), f32)
    for c in range(C):
        Wbf = Wbf.at[c * box_last_in:(c + 1) * box_last_in,
                     num_classes + c * box_len:
                     num_classes + (c + 1) * box_len].set(wb[c].astype(f32))

    b_out = jnp.zeros((1, out_pad), f32)
    b_out = b_out.at[:, :num_classes].set(bc.reshape(1, num_classes).astype(f32))
    b_out = b_out.at[:, num_classes:out_width].set(
        bb.reshape(1, C * box_len).astype(f32))

    # ---- row tiling: big tiles, but keep >= 2 grid steps (v7x megacore) ----
    tile_n = max(8, min(tile_n, _round_up(pl.cdiv(N, 2), 8)))
    n_pad = _round_up(N, tile_n)
    if n_pad != N:
        x = jnp.pad(x, ((0, n_pad - N), (0, 0)))     # cheap row-only pad

    weights = [W1, b1]
    for w, b in cls_mid + box_mid:
        weights += [w, b]
    weights += [Wcf, Wbf, b_out]

    # x block: last dim = full array extent (300) is legal; no lane padding.
    in_specs = [pl.BlockSpec((tile_n, d_in), lambda i: (i, 0))]
    for a in weights:
        in_specs.append(pl.BlockSpec(a.shape, lambda i: (0, 0)))

    kernel = _make_kernel(len(cls_mid), len(box_mid), cls_h1_pad)

    out = pl.pallas_call(
        kernel,
        out_shape=jax.ShapeDtypeStruct((n_pad, out_pad), f32),
        grid=(n_pad // tile_n,),
        in_specs=in_specs,
        out_specs=pl.BlockSpec((tile_n, out_pad), lambda i: (i, 0)),
        compiler_params=pltpu.CompilerParams(dimension_semantics=("parallel",)),
    )(x, *weights)

    logits = out[:N, :num_classes]
    box = out[:N, num_classes:num_classes + C * box_len]
    return logits, box


# ------------------------- pure-JAX reference check --------------------------

def _ref_forward(x, cls_params, box_params):
    num_classes = cls_params[-1][0].shape[-1]

    def mlp(h, params):
        for li, (w, b) in enumerate(params):
            h = jnp.dot(h, w, precision=jax.lax.Precision.HIGHEST) + b
            if li < len(params) - 1:
                h = jnp.maximum(h, 0.0)
        return h

    logits = mlp(x, cls_params)
    boxes = []
    for c in range(num_classes):
        params_c = [(w[c], b[c]) for (w, b) in box_params]
        boxes.append(mlp(x, params_c))
    return logits, jnp.concatenate(boxes, axis=1)


# ----------------------------------- main ------------------------------------

def _init_mlp(key, dims, stack=None):
    params = []
    for i in range(len(dims) - 1):
        key, kw, kb = jax.random.split(key, 3)
        w_shape = (dims[i], dims[i + 1]) if stack is None else (stack, dims[i], dims[i + 1])
        b_shape = (1, dims[i + 1]) if stack is None else (stack, 1, dims[i + 1])
        w = jax.random.normal(kw, w_shape, jnp.float32) / jnp.sqrt(float(dims[i]))
        b = 0.01 * jax.random.normal(kb, b_shape, jnp.float32)
        params.append((w, b))
    return params


if __name__ == "__main__":
    key = jax.random.PRNGKey(0)

    # Small, module-consistent shapes (PointGNN-ish): 300-d point features,
    # 4 classes, 7-parameter box encoding.
    N = 256
    cls_MLP_depth_lst = [300, 64, 4]
    box_MLP_depth_lst = [300, 64, 64]
    box_encoding_len = get_box_encoding_len("classaware_all_class_box_encoding")
    num_classes = cls_MLP_depth_lst[-1]
    box_depths_full = box_MLP_depth_lst + [box_encoding_len]

    ks = jax.random.split(key, 3)
    x = jax.random.normal(ks[0], (N, cls_MLP_depth_lst[0]), jnp.float32)
    cls_params = _init_mlp(ks[1], cls_MLP_depth_lst)
    box_params = _init_mlp(ks[2], box_depths_full, stack=num_classes)

    logits, box = class_aware_predictor(x, cls_params, box_params)
    logits, box = jax.block_until_ready((logits, box))

    ref_logits, ref_box = _ref_forward(x, cls_params, box_params)
    assert logits.shape == (N, num_classes)
    assert box.shape == (N, num_classes * box_encoding_len)
    assert jnp.allclose(logits, ref_logits, rtol=1e-4, atol=1e-4), "logits mismatch"
    assert jnp.allclose(box, ref_box, rtol=1e-4, atol=1e-4), "box mismatch"

    print("KERNEL_OK")
</pallas_src>

<mosaic_0001>
module attributes {stable_mosaic.version = 11 : i64} {
  func.func @kernel(%arg0: i32, %arg1: memref<128x300xf32, #tpu.memory_space<vmem>>, %arg2: memref<300x384xf32, #tpu.memory_space<vmem>>, %arg3: memref<1x384xf32, #tpu.memory_space<vmem>>, %arg4: memref<256x256xf32, #tpu.memory_space<vmem>>, %arg5: memref<1x256xf32, #tpu.memory_space<vmem>>, %arg6: memref<128x128xf32, #tpu.memory_space<vmem>>, %arg7: memref<256x128xf32, #tpu.memory_space<vmem>>, %arg8: memref<1x128xf32, #tpu.memory_space<vmem>>, %arg9: memref<128x128xf32, #tpu.memory_space<vmem>>) attributes {dimension_semantics = [#tpu.dimension_semantics<parallel>], iteration_bounds = array<i64: 2>, scalar_prefetch = 0 : i64, scratch_operands = 0 : i64, tpu.core_type = #tpu.core_type<tc>, window_params = [{transform_indices = @transform_0, window_bounds = array<i64: 128, 300>}, {pipeline_mode = #tpu.pipeline_mode<synchronous>, transform_indices = @transform_1, window_bounds = array<i64: 300, 384>}, {pipeline_mode = #tpu.pipeline_mode<synchronous>, transform_indices = @transform_2, window_bounds = array<i64: 1, 384>}, {pipeline_mode = #tpu.pipeline_mode<synchronous>, transform_indices = @transform_3, window_bounds = array<i64: 256, 256>}, {pipeline_mode = #tpu.pipeline_mode<synchronous>, transform_indices = @transform_4, window_bounds = array<i64: 1, 256>}, {pipeline_mode = #tpu.pipeline_mode<synchronous>, transform_indices = @transform_5, window_bounds = array<i64: 128, 128>}, {pipeline_mode = #tpu.pipeline_mode<synchronous>, transform_indices = @transform_6, window_bounds = array<i64: 256, 128>}, {pipeline_mode = #tpu.pipeline_mode<synchronous>, transform_indices = @transform_7, window_bounds = array<i64: 1, 128>}, {transform_indices = @transform_8, window_bounds = array<i64: 128, 128>}]} {
    %c0 = arith.constant 0 : index
    %c0_0 = arith.constant 0 : index
    %0 = vector.load %arg1[%c0, %c0_0] : memref<128x300xf32, #tpu.memory_space<vmem>>, vector<128x300xf32>
    %c0_1 = arith.constant 0 : index
    %c0_2 = arith.constant 0 : index
    %1 = vector.load %arg2[%c0_1, %c0_2] : memref<300x384xf32, #tpu.memory_space<vmem>>, vector<300x384xf32>
    %c0_3 = arith.constant 0 : index
    %c0_4 = arith.constant 0 : index
    %2 = vector.load %arg3[%c0_3, %c0_4] : memref<1x384xf32, #tpu.memory_space<vmem>>, vector<1x384xf32>
    %cst = arith.constant dense<0.000000e+00> : vector<128x384xf32>
    %3 = tpu.matmul %0, %1, %cst {dimension_numbers = #tpu.dot_dimension_numbers<[1], [0], [0], [1], [0, 0, 1, 1], [], []>} : vector<128x300xf32>, vector<300x384xf32>, vector<128x384xf32> -> vector<128x384xf32>
    %4 = vector.broadcast %2 : vector<1x384xf32> to vector<128x384xf32>
    %5 = arith.addf %3, %4 : vector<128x384xf32>
    %cst_5 = arith.constant 0.000000e+00 : f32
    %6 = vector.broadcast %cst_5 : f32 to vector<128x384xf32>
    %7 = arith.maximumf %5, %6 : vector<128x384xf32>
    %8 = vector.extract_strided_slice %7 {offsets = [0, 0], sizes = [128, 128], strides = [1, 1]} : vector<128x384xf32> to vector<128x128xf32>
    %9 = vector.extract_strided_slice %7 {offsets = [0, 128], sizes = [128, 256], strides = [1, 1]} : vector<128x384xf32> to vector<128x256xf32>
    %c0_6 = arith.constant 0 : index
    %c0_7 = arith.constant 0 : index
    %10 = vector.load %arg4[%c0_6, %c0_7] : memref<256x256xf32, #tpu.memory_space<vmem>>, vector<256x256xf32>
    %c0_8 = arith.constant 0 : index
    %c0_9 = arith.constant 0 : index
    %11 = vector.load %arg5[%c0_8, %c0_9] : memref<1x256xf32, #tpu.memory_space<vmem>>, vector<1x256xf32>
    %cst_10 = arith.constant dense<0.000000e+00> : vector<128x256xf32>
    %12 = tpu.matmul %9, %10, %cst_10 {dimension_numbers = #tpu.dot_dimension_numbers<[1], [0], [0], [1], [0, 0, 1, 1], [], []>} : vector<128x256xf32>, vector<256x256xf32>, vector<128x256xf32> -> vector<128x256xf32>
    %13 = vector.broadcast %11 : vector<1x256xf32> to vector<128x256xf32>
    %14 = arith.addf %12, %13 : vector<128x256xf32>
    %cst_11 = arith.constant 0.000000e+00 : f32
    %15 = vector.broadcast %cst_11 : f32 to vector<128x256xf32>
    %16 = arith.maximumf %14, %15 : vector<128x256xf32>
    %c0_12 = arith.constant 0 : index
    %c0_13 = arith.constant 0 : index
    %17 = vector.load %arg6[%c0_12, %c0_13] : memref<128x128xf32, #tpu.memory_space<vmem>>, vector<128x128xf32>
    %c0_14 = arith.constant 0 : index
    %c0_15 = arith.constant 0 : index
    %18 = vector.load %arg7[%c0_14, %c0_15] : memref<256x128xf32, #tpu.memory_space<vmem>>, vector<256x128xf32>
    %c0_16 = arith.constant 0 : index
    %c0_17 = arith.constant 0 : index
    %19 = vector.load %arg8[%c0_16, %c0_17] : memref<1x128xf32, #tpu.memory_space<vmem>>, vector<1x128xf32>
    %cst_18 = arith.constant dense<0.000000e+00> : vector<128x128xf32>
    %20 = tpu.matmul %8, %17, %cst_18 {dimension_numbers = #tpu.dot_dimension_numbers<[1], [0], [0], [1], [0, 0, 1, 1], [], []>} : vector<128x128xf32>, vector<128x128xf32>, vector<128x128xf32> -> vector<128x128xf32>
    %cst_19 = arith.constant dense<0.000000e+00> : vector<128x128xf32>
    %21 = tpu.matmul %16, %18, %cst_19 {dimension_numbers = #tpu.dot_dimension_numbers<[1], [0], [0], [1], [0, 0, 1, 1], [], []>} : vector<128x256xf32>, vector<256x128xf32>, vector<128x128xf32> -> vector<128x128xf32>
    %22 = arith.addf %20, %21 : vector<128x128xf32>
    %23 = vector.broadcast %19 : vector<1x128xf32> to vector<128x128xf32>
    %24 = arith.addf %22, %23 : vector<128x128xf32>
    %c0_20 = arith.constant 0 : index
    %c0_21 = arith.constant 0 : index
    %25 = vector.load %arg9[%c0_20, %c0_21] : memref<128x128xf32, #tpu.memory_space<vmem>>, vector<128x128xf32>
    tpu.vector_store %arg9[%c0_20, %c0_21], %24 {strides = array<i32>} : memref<128x128xf32, #tpu.memory_space<vmem>>, vector<128x128xf32>,
    return
  }
  func.func @transform_0(%arg0: i32) -> (i32, i32) {
    %c0_i32 = arith.constant 0 : i32
    %c0_i32_0 = arith.constant 0 : i32
    return %arg0, %c0_i32 : i32, i32
  }
  func.func @transform_1(%arg0: i32) -> (i32, i32) {
    %c0_i32 = arith.constant 0 : i32
    %c0_i32_0 = arith.constant 0 : i32
    %c0_i32_1 = arith.constant 0 : i32
    return %c0_i32, %c0_i32_0 : i32, i32
  }
  func.func @transform_2(%arg0: i32) -> (i32, i32) {
    %c0_i32 = arith.constant 0 : i32
    %c0_i32_0 = arith.constant 0 : i32
    %c0_i32_1 = arith.constant 0 : i32
    return %c0_i32, %c0_i32_0 : i32, i32
  }
  func.func @transform_3(%arg0: i32) -> (i32, i32) {
    %c0_i32 = arith.constant 0 : i32
    %c0_i32_0 = arith.constant 0 : i32
    %c0_i32_1 = arith.constant 0 : i32
    return %c0_i32, %c0_i32_0 : i32, i32
  }
  func.func @transform_4(%arg0: i32) -> (i32, i32) {
    %c0_i32 = arith.constant 0 : i32
    %c0_i32_0 = arith.constant 0 : i32
    %c0_i32_1 = arith.constant 0 : i32
    return %c0_i32, %c0_i32_0 : i32, i32
  }
  func.func @transform_5(%arg0: i32) -> (i32, i32) {
    %c0_i32 = arith.constant 0 : i32
    %c0_i32_0 = arith.constant 0 : i32
    %c0_i32_1 = arith.constant 0 : i32
    return %c0_i32, %c0_i32_0 : i32, i32
  }
  func.func @transform_6(%arg0: i32) -> (i32, i32) {
    %c0_i32 = arith.constant 0 : i32
    %c0_i32_0 = arith.constant 0 : i32
    %c0_i32_1 = arith.constant 0 : i32
    return %c0_i32, %c0_i32_0 : i32, i32
  }
  func.func @transform_7(%arg0: i32) -> (i32, i32) {
    %c0_i32 = arith.constant 0 : i32
    %c0_i32_0 = arith.constant 0 : i32
    %c0_i32_1 = arith.constant 0 : i32
    return %c0_i32, %c0_i32_0 : i32, i32
  }
  func.func @transform_8(%arg0: i32) -> (i32, i32) {
    %c0_i32 = arith.constant 0 : i32
    %c0_i32_0 = arith.constant 0 : i32
    return %arg0, %c0_i32 : i32, i32
  }
}

</mosaic_0001>

<llo_original>
// kernel: tpu_custom_call.1
$region0: #{tpu_custom_call.1}
  #allocation0 [shape = 'u32[]', space=smem, size = 0x4, offset = 0x4, fixed_abs, tag = 'smem constant byte address 0x4 - core index']
  #allocation1 [shape = 'u32[144,128]{1,0:T(1,128)}', space=vmem, size = 0x12000, scoped, tag = 'internal scratch']
  %s0 = inlined_call_operand.vmem [shape: f32[256,300], index: 0, kind: input, shape index: {}]
  %s1 = inlined_call_operand.vmem [shape: f32[300,384], index: 1, kind: input, shape index: {}]
  %s2 = inlined_call_operand.vmem [shape: f32[1,384], index: 2, kind: input, shape index: {}]
  %s3 = inlined_call_operand.hbm [shape: f32[256,256], index: 3, kind: input, shape index: {}]
  %s4 = inlined_call_operand.vmem [shape: f32[1,256], index: 4, kind: input, shape index: {}]
  %s5 = inlined_call_operand.vmem [shape: f32[128,128], index: 5, kind: input, shape index: {}]
  %s6 = inlined_call_operand.vmem [shape: f32[256,128], index: 6, kind: input, shape index: {}]
  %s7 = inlined_call_operand.vmem [shape: f32[1,128], index: 7, kind: input, shape index: {}]
  %s8 = inlined_call_operand.hbm [shape: f32[256,128], index: 8, kind: output, shape index: {}]
  %s9 = sld [smem:[#allocation0]]
  $region69: #{tpu_custom_call.1} parent=0
    _
  %s11 = ssub.s32 1, %s9
  %s12 = scalar_select 0, %s11, %s9
  $region1: #{tpu_custom_call.1} parent=0
    #allocation2 [shape = 'u8[262144]{0}', space=vmem, size = 0x40000, scoped, tag = 'input window, operand 3, single buffered']
    #allocation3 [shape = 's32[2]{0}', space=sflag, size = 0x8, scoped, tag = 'scoped memory for tpu_custom_call.1']
    #allocation4 [shape = 's32[2]{0}', space=sflag, size = 0x8, scoped, tag = 'scoped memory for tpu_custom_call.1']
    #allocation5 [shape = 'u8[131072]{0}', space=vmem, size = 0x20000, scoped, tag = 'output window, operand 0']
    %13 = vsyncpa [#allocation3], 0
    %14 = vsyncpa [#allocation4], 0
    %s15 = scalar_lea.sflag [#allocation4], 1
    %16 = vsyncpa %s15, 0
    loop: start=0, step=1, limit=4
    $region2: #{tpu_custom_call.1} parent=1 // loop_pre_header
      _
    $region3: #{tpu_custom_call.1} parent=1 // loop_header
      %s18 = sphi 0, %s22
      %p19 = scmp.ge.s32.totalorder %s18, 4
      %s28 = sphi 0, %s30
      %s31 = sphi 0, %s28
      %s32 = sphi 0, %s31
      %s48 = sphi 0, %s32
      %s52 = sphi 0, %s52
      %s54 = sphi 0, %s52
      %s55 = sphi 0, %s54
      %s69 = sphi 0, %s55
      %s73 = sphi 0, %s73
      %s75 = sphi 0, %s73
      %s76 = sphi 0, %s75
      %s90 = sphi 0, %s76
      %s94 = sphi 0, %s94
      %s96 = sphi 0, %s94
      %s97 = sphi 0, %s96
      %s111 = sphi 0, %s97
      %s115 = sphi 0, %s115
      %s117 = sphi 0, %s115
      %s118 = sphi 0, %s117
      %s132 = sphi 0, %s118
      %s136 = sphi 0, %s136
      %s138 = sphi 0, %s136
      %s139 = sphi 0, %s138
      %s153 = sphi 0, %s139
      %s157 = sphi 0, %s157
      %s159 = sphi 0, %s157
      %s160 = sphi 0, %s159
      %s174 = sphi 0, %s160
      %s178 = sphi 0, %s178
      %s180 = sphi 0, %s178
      %s181 = sphi 0, %s180
      %s195 = sphi 0, %s181
      %s201 = sphi 0, %s203
      %s204 = sphi 0, %s201
      %s205 = sphi 0, %s204
      %s221 = sphi 0, %s205
    $region4: #{tpu_custom_call.1} parent=1 // loop_header_branch
      %21 = sbr.rel (%p19) target = $region8
    $region5: #{tpu_custom_call.1} parent=1 // loop_body
      %s23 = ssub.s32 %s18, 1
      %s24 = ssub.s32 %s18, 2
      %s25 = sadd.s32 %s18, 1
      %s26 = ssub.s32 %s18, %s25
      %p27 = scmp.eq.s32.totalorder %s26, 0
      %s29 = sadd.s32 %s28, 1
      %s30 = scalar_select %p27, %s28, %s29
      %p33 = pneg %p27
      %p34 = scmp.eq.s32.totalorder %s18, 1
      %p35 = por %p33, %p34
      %p36 = scmp.ne.s32.totalorder %s28, %s31
      %p37 = scmp.eq.s32.totalorder %s18, 0
      %p38 = por %p36, %p37
      %p39 = scmp.ne.s32.totalorder %s28, %s31
      %p40 = scmp.eq.s32.totalorder %s23, 1
      %p41 = por %p39, %p40
      %p42 = scmp.ne.s32.totalorder %s31, %s32
      %p43 = scmp.eq.s32.totalorder %s23, 0
      %p44 = por %p42, %p43
      %p45 = scmp.ne.s32.totalorder %s31, %s32
      %p46 = scmp.eq.s32.totalorder %s24, 1
      %p47 = por %p45, %p46
      %p49 = scmp.ne.s32.totalorder %s32, %s48
      %p50 = scmp.eq.s32.totalorder %s24, 0
      %p51 = por %p49, %p50
      %s53 = sadd.s32 %s52, 1
      %p56 = scmp.eq.s32.totalorder %s18, 1
      %p57 = scmp.ne.s32.totalorder %s52, %s54
      %p58 = scmp.eq.s32.totalorder %s18, 0
      %p59 = por %p57, %p58
      %p60 = scmp.ne.s32.totalorder %s52, %s54
      %p61 = scmp.eq.s32.totalorder %s23, 1
      %p62 = por %p60, %p61
      %p63 = scmp.ne.s32.totalorder %s54, %s55
      %p64 = scmp.eq.s32.totalorder %s23, 0
      %p65 = por %p63, %p64
      %p66 = scmp.ne.s32.totalorder %s54, %s55
      %p67 = scmp.eq.s32.totalorder %s24, 1
      %p68 = por %p66, %p67
      %p70 = scmp.ne.s32.totalorder %s55, %s69
      %p71 = scmp.eq.s32.totalorder %s24, 0
      %p72 = por %p70, %p71
      %s74 = sadd.s32 %s73, 1
      %p77 = scmp.eq.s32.totalorder %s18, 1
      %p78 = scmp.ne.s32.totalorder %s73, %s75
      %p79 = scmp.eq.s32.totalorder %s18, 0
      %p80 = por %p78, %p79
      %p81 = scmp.ne.s32.totalorder %s73, %s75
      %p82 = scmp.eq.s32.totalorder %s23, 1
      %p83 = por %p81, %p82
      %p84 = scmp.ne.s32.totalorder %s75, %s76
      %p85 = scmp.eq.s32.totalorder %s23, 0
      %p86 = por %p84, %p85
      %p87 = scmp.ne.s32.totalorder %s75, %s76
      %p88 = scmp.eq.s32.totalorder %s24, 1
      %p89 = por %p87, %p88
      %p91 = scmp.ne.s32.totalorder %s76, %s90
      %p92 = scmp.eq.s32.totalorder %s24, 0
      %p93 = por %p91, %p92
      %s95 = sadd.s32 %s94, 1
      %p98 = scmp.eq.s32.totalorder %s18, 1
      %p99 = scmp.ne.s32.totalorder %s94, %s96
      %p100 = scmp.eq.s32.totalorder %s18, 0
      %p101 = por %p99, %p100
      %p102 = scmp.ne.s32.totalorder %s94, %s96
      %p103 = scmp.eq.s32.totalorder %s23, 1
      %p104 = por %p102, %p103
      %p105 = scmp.ne.s32.totalorder %s96, %s97
      %p106 = scmp.eq.s32.totalorder %s23, 0
      %p107 = por %p105, %p106
      %p108 = scmp.ne.s32.totalorder %s96, %s97
      %p109 = scmp.eq.s32.totalorder %s24, 1
      %p110 = por %p108, %p109
      %p112 = scmp.ne.s32.totalorder %s97, %s111
      %p113 = scmp.eq.s32.totalorder %s24, 0
      %p114 = por %p112, %p113
      %s116 = sadd.s32 %s115, 1
      %p119 = scmp.eq.s32.totalorder %s18, 1
      %p120 = scmp.ne.s32.totalorder %s115, %s117
      %p121 = scmp.eq.s32.totalorder %s18, 0
      %p122 = por %p120, %p121
      %p123 = scmp.ne.s32.totalorder %s115, %s117
      %p124 = scmp.eq.s32.totalorder %s23, 1
      %p125 = por %p123, %p124
      %p126 = scmp.ne.s32.totalorder %s117, %s118
      %p127 = scmp.eq.s32.totalorder %s23, 0
      %p128 = por %p126, %p127
      %p129 = scmp.ne.s32.totalorder %s117, %s118
      %p130 = scmp.eq.s32.totalorder %s24, 1
      %p131 = por %p129, %p130
      %p133 = scmp.ne.s32.totalorder %s118, %s132
      %p134 = scmp.eq.s32.totalorder %s24, 0
      %p135 = por %p133, %p134
      %s137 = sadd.s32 %s136, 1
      %p140 = scmp.eq.s32.totalorder %s18, 1
      %p141 = scmp.ne.s32.totalorder %s136, %s138
      %p142 = scmp.eq.s32.totalorder %s18, 0
      %p143 = por %p141, %p142
      %p144 = scmp.ne.s32.totalorder %s136, %s138
      %p145 = scmp.eq.s32.totalorder %s23, 1
      %p146 = por %p144, %p145
      %p147 = scmp.ne.s32.totalorder %s138, %s139
      %p148 = scmp.eq.s32.totalorder %s23, 0
      %p149 = por %p147, %p148
      %p150 = scmp.ne.s32.totalorder %s138, %s139
      %p151 = scmp.eq.s32.totalorder %s24, 1
      %p152 = por %p150, %p151
      %p154 = scmp.ne.s32.totalorder %s139, %s153
      %p155 = scmp.eq.s32.totalorder %s24, 0
      %p156 = por %p154, %p155
      %s158 = sadd.s32 %s157, 1
      %p161 = scmp.eq.s32.totalorder %s18, 1
      %p162 = scmp.ne.s32.totalorder %s157, %s159
      %p163 = scmp.eq.s32.totalorder %s18, 0
      %p164 = por %p162, %p163
      %p165 = scmp.ne.s32.totalorder %s157, %s159
      %p166 = scmp.eq.s32.totalorder %s23, 1
      %p167 = por %p165, %p166
      %p168 = scmp.ne.s32.totalorder %s159, %s160
      %p169 = scmp.eq.s32.totalorder %s23, 0
      %p170 = por %p168, %p169
      %p171 = scmp.ne.s32.totalorder %s159, %s160
      %p172 = scmp.eq.s32.totalorder %s24, 1
      %p173 = por %p171, %p172
      %p175 = scmp.ne.s32.totalorder %s160, %s174
      %p176 = scmp.eq.s32.totalorder %s24, 0
      %p177 = por %p175, %p176
      %s179 = sadd.s32 %s178, 1
      %p182 = scmp.eq.s32.totalorder %s18, 1
      %p183 = scmp.ne.s32.totalorder %s178, %s180
      %p184 = scmp.eq.s32.totalorder %s18, 0
      %p185 = por %p183, %p184
      %p186 = scmp.ne.s32.totalorder %s178, %s180
      %p187 = scmp.eq.s32.totalorder %s23, 1
      %p188 = por %p186, %p187
      %p189 = scmp.ne.s32.totalorder %s180, %s181
      %p190 = scmp.eq.s32.totalorder %s23, 0
      %p191 = por %p189, %p190
      %p192 = scmp.ne.s32.totalorder %s180, %s181
      %p193 = scmp.eq.s32.totalorder %s24, 1
      %p194 = por %p192, %p193
      %p196 = scmp.ne.s32.totalorder %s181, %s195
      %p197 = scmp.eq.s32.totalorder %s24, 0
      %p198 = por %p196, %p197
      %s199 = ssub.s32 %s18, %s25
      %p200 = scmp.eq.s32.totalorder %s199, 0
      %s202 = sadd.s32 %s201, 1
      %s203 = scalar_select %p200, %s201, %s202
      %p206 = pneg %p200
      %p207 = scmp.eq.s32.totalorder %s18, 1
      %p208 = por %p206, %p207
      %p209 = scmp.ne.s32.totalorder %s201, %s204
      %p210 = scmp.eq.s32.totalorder %s18, 0
      %p211 = por %p209, %p210
      %p212 = scmp.ne.s32.totalorder %s201, %s204
      %p213 = scmp.eq.s32.totalorder %s23, 1
      %p214 = por %p212, %p213
      %p215 = scmp.ne.s32.totalorder %s204, %s205
      %p216 = scmp.eq.s32.totalorder %s23, 0
      %p217 = por %p215, %p216
      %p218 = scmp.ne.s32.totalorder %s204, %s205
      %p219 = scmp.eq.s32.totalorder %s24, 1
      %p220 = por %p218, %p219
      %p222 = scmp.ne.s32.totalorder %s205, %s221
      %p223 = scmp.eq.s32.totalorder %s24, 0
      %p224 = por %p222, %p223
      %p225 = scmp.le.s32.totalorder 1, %s18
      %p226 = scmp.lt.s32.totalorder %s18, 3
      %p227 = pnand %p225, %p226
      %p228 = pneg %p227
      // Predicated region
      $region9: #{tpu_custom_call.1} parent=5 // pred_check
        _
      $region10: #{tpu_custom_call.1} parent=5 // pred_check_branch
        %230 = sbr.rel (%p227) target = $region12
      $region11: #{tpu_custom_call.1} parent=5 // pred_region
        %s231 = ssub.s32 %s18, 1
        // Predicated region
        $region13: #{tpu_custom_call.1} parent=11 // pred_check
          %p232 = pneg %p65
        $region14: #{tpu_custom_call.1} parent=11 // pred_check_branch
          %234 = sbr.rel (%p232) target = $region16
        $region15: #{tpu_custom_call.1} parent=11 // pred_region
          _
        $region16: #{tpu_custom_call.1} parent=11 // pred_fallthru
          _
        // Predicated region
        $region17: #{tpu_custom_call.1} parent=11 // pred_check
          %p235 = pneg %p86
        $region18: #{tpu_custom_call.1} parent=11 // pred_check_branch
          %237 = sbr.rel (%p235) target = $region20
        $region19: #{tpu_custom_call.1} parent=11 // pred_region
          _
        $region20: #{tpu_custom_call.1} parent=11 // pred_fallthru
          _
        // Predicated region
        $region21: #{tpu_custom_call.1} parent=11 // pred_check
          %p238 = pneg %p107
        $region22: #{tpu_custom_call.1} parent=11 // pred_check_branch
          %240 = sbr.rel (%p238) target = $region24
        $region23: #{tpu_custom_call.1} parent=11 // pred_region
          %s242 = ssub.s32 8192, 8192
          %243 = vsyncadd [#allocation3], %s242
          %s244 = sshll.u32 [#allocation2], 4
          %s245 = int_to_ptr.vmem [resolvable:$true] %s244
          %250 = dma.hbm_to_vmem [thread:$0]  %s3, 8192, %s245, [#allocation3], 256, 256, 16
        $region24: #{tpu_custom_call.1} parent=11 // pred_fallthru
          _
        // Predicated region
        $region25: #{tpu_custom_call.1} parent=11 // pred_check
          %p251 = pneg %p128
        $region26: #{tpu_custom_call.1} parent=11 // pred_check_branch
          %253 = sbr.rel (%p251) target = $region28
        $region27: #{tpu_custom_call.1} parent=11 // pred_region
          _
        $region28: #{tpu_custom_call.1} parent=11 // pred_fallthru
          _
        // Predicated region
        $region29: #{tpu_custom_call.1} parent=11 // pred_check
          %p254 = pneg %p149
        $region30: #{tpu_custom_call.1} parent=11 // pred_check_branch
          %256 = sbr.rel (%p254) target = $region32
        $region31: #{tpu_custom_call.1} parent=11 // pred_region
          _
        $region32: #{tpu_custom_call.1} parent=11 // pred_fallthru
          _
        // Predicated region
        $region33: #{tpu_custom_call.1} parent=11 // pred_check
          %p257 = pneg %p170
        $region34: #{tpu_custom_call.1} parent=11 // pred_check_branch
          %259 = sbr.rel (%p257) target = $region36
        $region35: #{tpu_custom_call.1} parent=11 // pred_region
          _
        $region36: #{tpu_custom_call.1} parent=11 // pred_fallthru
          _
        // Predicated region
        $region37: #{tpu_custom_call.1} parent=11 // pred_check
          %p260 = pneg %p191
        $region38: #{tpu_custom_call.1} parent=11 // pred_check_branch
          %262 = sbr.rel (%p260) target = $region40
        $region39: #{tpu_custom_call.1} parent=11 // pred_region
          _
        $region40: #{tpu_custom_call.1} parent=11 // pred_fallthru
          _
      $region12: #{tpu_custom_call.1} parent=5 // pred_fallthru
        _
      %p263 = scmp.lt.s32.totalorder %s18, 2
      // Predicated region
      $region41: #{tpu_custom_call.1} parent=5 // pred_check
        %p264 = pneg %p263
      $region42: #{tpu_custom_call.1} parent=5 // pred_check_branch
        %266 = sbr.rel (%p264) target = $region44
      $region43: #{tpu_custom_call.1} parent=5 // pred_region
        // Predicated region
        $region45: #{tpu_custom_call.1} parent=43 // pred_check
          %p267 = pneg %p38
        $region46: #{tpu_custom_call.1} parent=43 // pred_check_branch
          %269 = sbr.rel (%p267) target = $region48
        $region47: #{tpu_custom_call.1} parent=43 // pred_region
          %s270 = smul.u32 16, %s18
          %p271 = scmp.lt.s32.totalorder %s270, 31
          %s272 = scalar_select %p271, %s270, 31
          %s273 = smul.addr %s272, 3
          %s274 = smul.addr %s273, 8
          %s275 = scalar_lea.vmem %s0, %s274
          %s276 = smul.u32 16, %s18
        $region48: #{tpu_custom_call.1} parent=43 // pred_fallthru
          _
      $region44: #{tpu_custom_call.1} parent=5 // pred_fallthru
        _
      %p277 = scmp.le.s32.totalorder 1, %s18
      %p278 = scmp.lt.s32.totalorder %s18, 3
      %p279 = pnand %p277, %p278
      %p280 = pneg %p279
      // Predicated region
      $region49: #{tpu_custom_call.1} parent=5 // pred_check
        _
      $region50: #{tpu_custom_call.1} parent=5 // pred_check_branch
        %282 = sbr.rel (%p279) target = $region52
      $region51: #{tpu_custom_call.1} parent=5 // pred_region
        %s283 = ssub.s32 %s18, 1
        // Predicated region
        $region53: #{tpu_custom_call.1} parent=51 // pred_check
          %p284 = pneg %p107
        $region54: #{tpu_custom_call.1} parent=51 // pred_check_branch
          %286 = sbr.rel (%p284) target = $region56
        $region55: #{tpu_custom_call.1} parent=51 // pred_region
          %287 = dma.done [#allocation3], 8192
        $region56: #{tpu_custom_call.1} parent=51 // pred_fallthru
          _
        %s288 = smul.u32 16, %s23
        %p289 = scmp.lt.s32.totalorder %s288, 31
        %s290 = scalar_select %p289, %s288, 31
        %s291 = smul.addr %s290, 3
        %s292 = smul.addr %s291, 8
        %s293 = scalar_lea.vmem %s0, %s292
        %p294 = pneg %p44
        %p295 = pneg %p41
        %p296 = pneg %p65
        %p297 = pneg %p62
        %p298 = pneg %p86
        %p299 = pneg %p83
        %p300 = pneg %p107
        %p301 = pneg %p104
        %p302 = pneg %p128
        %p303 = pneg %p125
        %p304 = pneg %p149
        %p305 = pneg %p146
        %p306 = pneg %p170
        %p307 = pneg %p167
        %p308 = pneg %p191
        %p309 = pneg %p188
        %p310 = pneg %p217
        %p311 = pneg %p214
        %s312 = sand.u32 %s204, 1
        %s313 = scalar_lea.sflag [#allocation4], %s312
        %s314 = sand.u32 %s204, 1
        %s315 = smul.addr %s314, 128
        %s316 = scalar_lea.vmem [#allocation5], %s315
        %s317 = smul.u32 16, %s23
        %p318 = scmp.lt.s32.totalorder %s317, 31
        %s319 = scalar_select %p318, %s317, 31
        %s320 = smul.addr %s319, 3
        %s321 = smul.addr %s320, 8
        %s322 = scalar_lea.vmem %s0, %s321
        %s323 = smul.u32 16, %s23
        %s324 = smul.u32 16, %s23
        %v325 = vld [vmem:[%s322] sm:$0xff]
        %v326 = vld [vmem:[%s322 + $0x8] sm:$0xff]
        %v327 = vld [vmem:[%s322 + $0x10] sm:$0xff]
        %v328 = vld [vmem:[%s322 + $0x18] sm:$0xff]
        %v329 = vld [vmem:[%s322 + $0x20] sm:$0xff]
        %v330 = vld [vmem:[%s322 + $0x28] sm:$0xff]
        %v331 = vld [vmem:[%s322 + $0x30] sm:$0xff]
        %v332 = vld [vmem:[%s322 + $0x38] sm:$0xff]
        %v333 = vld [vmem:[%s322 + $0x40] sm:$0xff]
        %v334 = vld [vmem:[%s322 + $0x48] sm:$0xff]
        %v335 = vld [vmem:[%s322 + $0x50] sm:$0xff]
        %v336 = vld [vmem:[%s322 + $0x58] sm:$0xff]
        %v337 = vld [vmem:[%s322 + $0x60] sm:$0xff]
        %v338 = vld [vmem:[%s322 + $0x68] sm:$0xff]
        %v339 = vld [vmem:[%s322 + $0x70] sm:$0xff]
        %v340 = vld [vmem:[%s322 + $0x78] sm:$0xff]
        %v341 = vld [vmem:[%s322 + $0x80] sm:$0xff]
        %v342 = vld [vmem:[%s322 + $0x88] sm:$0xff]
        %v343 = vld [vmem:[%s322 + $0x90] sm:$0xff]
        %v344 = vld [vmem:[%s322 + $0x98] sm:$0xff]
        %v345 = vld [vmem:[%s322 + $0xa0] sm:$0xff]
        %v346 = vld [vmem:[%s322 + $0xa8] sm:$0xff]
        %v347 = vld [vmem:[%s322 + $0xb0] sm:$0xff]
        %v348 = vld [vmem:[%s322 + $0xb8] sm:$0xff]
        %v349 = vld [vmem:[%s322 + $0xc0] sm:$0xff]
        %v350 = vld [vmem:[%s322 + $0xc8] sm:$0xff]
        %v351 = vld [vmem:[%s322 + $0xd0] sm:$0xff]
        %v352 = vld [vmem:[%s322 + $0xd8] sm:$0xff]
        %v353 = vld [vmem:[%s322 + $0xe0] sm:$0xff]
        %v354 = vld [vmem:[%s322 + $0xe8] sm:$0xff]
        %v355 = vld [vmem:[%s322 + $0xf0] sm:$0xff]
        %v356 = vld [vmem:[%s322 + $0xf8] sm:$0xff]
        %v357 = vld [vmem:[%s322 + $0x100] sm:$0xff]
        %v358 = vld [vmem:[%s322 + $0x108] sm:$0xff]
        %v359 = vld [vmem:[%s322 + $0x110] sm:$0xff]
        %v360 = vld [vmem:[%s322 + $0x118] sm:$0xff]
        %v361 = vld [vmem:[%s322 + $0x120] sm:$0xff]
        %v362 = vld [vmem:[%s322 + $0x128] sm:$0xff]
        %v363 = vld [vmem:[%s322 + $0x130] sm:$0xff]
        %v364 = vld [vmem:[%s322 + $0x138] sm:$0xff]
        %v365 = vld [vmem:[%s322 + $0x140] sm:$0xff]
        %v366 = vld [vmem:[%s322 + $0x148] sm:$0xff]
        %v367 = vld [vmem:[%s322 + $0x150] sm:$0xff]
        %v368 = vld [vmem:[%s322 + $0x158] sm:$0xff]
        %v369 = vld [vmem:[%s322 + $0x160] sm:$0xff]
        %v370 = vld [vmem:[%s322 + $0x168] sm:$0xff]
        %v371 = vld [vmem:[%s322 + $0x170] sm:$0xff]
        %v372 = vld [vmem:[%s322 + $0x178] sm:$0xff]
        %v373 = vld [vmem:[%s1] sm:$0xff]
        %v374 = vld [vmem:[%s1 + $0x8] sm:$0xff]
        %v375 = vld [vmem:[%s1 + $0x10] sm:$0xff]
        %v376 = vld [vmem:[%s1 + $0x18] sm:$0xff]
        %v377 = vld [vmem:[%s1 + $0x20] sm:$0xff]
        %v378 = vld [vmem:[%s1 + $0x28] sm:$0xff]
        %v379 = vld [vmem:[%s1 + $0x30] sm:$0xff]
        %v380 = vld [vmem:[%s1 + $0x38] sm:$0xff]
        %v381 = vld [vmem:[%s1 + $0x40] sm:$0xff]
        %v382 = vld [vmem:[%s1 + $0x48] sm:$0xff]
        %v383 = vld [vmem:[%s1 + $0x50] sm:$0xff]
        %v384 = vld [vmem:[%s1 + $0x58] sm:$0xff]
        %v385 = vld [vmem:[%s1 + $0x60] sm:$0xff]
        %v386 = vld [vmem:[%s1 + $0x68] sm:$0xff]
        %v387 = vld [vmem:[%s1 + $0x70] sm:$0xff]
        %v388 = vld [vmem:[%s1 + $0x78] sm:$0xff]
        %v389 = vld [vmem:[%s1 + $0x80] sm:$0xff]
        %v390 = vld [vmem:[%s1 + $0x88] sm:$0xff]
        %v391 = vld [vmem:[%s1 + $0x90] sm:$0xff]
        %v392 = vld [vmem:[%s1 + $0x98] sm:$0xff]
        %v393 = vld [vmem:[%s1 + $0xa0] sm:$0xff]
        %v394 = vld [vmem:[%s1 + $0xa8] sm:$0xff]
        %v395 = vld [vmem:[%s1 + $0xb0] sm:$0xff]
        %v396 = vld [vmem:[%s1 + $0xb8] sm:$0xff]
        %v397 = vld [vmem:[%s1 + $0xc0] sm:$0xff]
        %v398 = vld [vmem:[%s1 + $0xc8] sm:$0xff]
        %v399 = vld [vmem:[%s1 + $0xd0] sm:$0xff]
        %v400 = vld [vmem:[%s1 + $0xd8] sm:$0xff]
        %v401 = vld [vmem:[%s1 + $0xe0] sm:$0xff]
        %v402 = vld [vmem:[%s1 + $0xe8] sm:$0xff]
        %v403 = vld [vmem:[%s1 + $0xf0] sm:$0xff]
        %v404 = vld [vmem:[%s1 + $0xf8] sm:$0xff]
        %v405 = vld [vmem:[%s1 + $0x100] sm:$0xff]
        %v406 = vld [vmem:[%s1 + $0x108] sm:$0xff]
        %v407 = vld [vmem:[%s1 + $0x110] sm:$0xff]
        %v408 = vld [vmem:[%s1 + $0x118] sm:$0xff]
        %v409 = vld [vmem:[%s1 + $0x120] sm:$0xff]
        %v410 = vld [vmem:[%s1 + $0x128] sm:$0xff]
        %v411 = vld [vmem:[%s1 + $0x130] sm:$0xff]
        %v412 = vld [vmem:[%s1 + $0x138] sm:$0xff]
        %v413 = vld [vmem:[%s1 + $0x140] sm:$0xff]
        %v414 = vld [vmem:[%s1 + $0x148] sm:$0xff]
        %v415 = vld [vmem:[%s1 + $0x150] sm:$0xff]
        %v416 = vld [vmem:[%s1 + $0x158] sm:$0xff]
        %v417 = vld [vmem:[%s1 + $0x160] sm:$0xff]
        %v418 = vld [vmem:[%s1 + $0x168] sm:$0xff]
        %v419 = vld [vmem:[%s1 + $0x170] sm:$0xff]
        %v420 = vld [vmem:[%s1 + $0x178] sm:$0xff]
        %v421 = vld [vmem:[%s1 + $0x180] sm:$0xff]
        %v422 = vld [vmem:[%s1 + $0x188] sm:$0xff]
        %v423 = vld [vmem:[%s1 + $0x190] sm:$0xff]
        %v424 = vld [vmem:[%s1 + $0x198] sm:$0xff]
        %v425 = vld [vmem:[%s1 + $0x1a0] sm:$0xff]
        %v426 = vld [vmem:[%s1 + $0x1a8] sm:$0xff]
        %v427 = vld [vmem:[%s1 + $0x1b0] sm:$0xff]
        %v428 = vld [vmem:[%s1 + $0x1b8] sm:$0xff]
        %v429 = vld [vmem:[%s1 + $0x1c0] sm:$0xff]
        %v430 = vld [vmem:[%s1 + $0x1c8] sm:$0xff]
        %v431 = vld [vmem:[%s1 + $0x1d0] sm:$0xff]
        %v432 = vld [vmem:[%s1 + $0x1d8] sm:$0xff]
        %v433 = vld [vmem:[%s1 + $0x1e0] sm:$0xff]
        %v434 = vld [vmem:[%s1 + $0x1e8] sm:$0xff]
        %v435 = vld [vmem:[%s1 + $0x1f0] sm:$0xff]
        %v436 = vld [vmem:[%s1 + $0x1f8] sm:$0xff]
        %v437 = vld [vmem:[%s1 + $0x200] sm:$0xff]
        %v438 = vld [vmem:[%s1 + $0x208] sm:$0xff]
        %v439 = vld [vmem:[%s1 + $0x210] sm:$0xff]
        %v440 = vld [vmem:[%s1 + $0x218] sm:$0xff]
        %v441 = vld [vmem:[%s1 + $0x220] sm:$0xff]
        %v442 = vld [vmem:[%s1 + $0x228] sm:$0xff]
        %v443 = vld [vmem:[%s1 + $0x230] sm:$0xff]
        %v444 = vld [vmem:[%s1 + $0x238] sm:$0xff]
        %v445 = vld [vmem:[%s1 + $0x240] sm:$0xff]
        %v446 = vld [vmem:[%s1 + $0x248] sm:$0xff]
        %v447 = vld [vmem:[%s1 + $0x250] sm:$0xff]
        %v448 = vld [vmem:[%s1 + $0x258] sm:$0xff]
        %v449 = vld [vmem:[%s1 + $0x260] sm:$0xff]
        %v450 = vld [vmem:[%s1 + $0x268] sm:$0xff]
        %v451 = vld [vmem:[%s1 + $0x270] sm:$0xff]
        %v452 = vld [vmem:[%s1 + $0x278] sm:$0xff]
        %v453 = vld [vmem:[%s1 + $0x280] sm:$0xff]
        %v454 = vld [vmem:[%s1 + $0x288] sm:$0xff]
        %v455 = vld [vmem:[%s1 + $0x290] sm:$0xff]
        %v456 = vld [vmem:[%s1 + $0x298] sm:$0xff]
        %v457 = vld [vmem:[%s1 + $0x2a0] sm:$0xff]
        %v458 = vld [vmem:[%s1 + $0x2a8] sm:$0xff]
        %v459 = vld [vmem:[%s1 + $0x2b0] sm:$0xff]
        %v460 = vld [vmem:[%s1 + $0x2b8] sm:$0xff]
        %v461 = vld [vmem:[%s1 + $0x2c0] sm:$0xff]
        %v462 = vld [vmem:[%s1 + $0x2c8] sm:$0xff]
        %v463 = vld [vmem:[%s1 + $0x2d0] sm:$0xff]
        %v464 = vld [vmem:[%s1 + $0x2d8] sm:$0xff]
        %v465 = vld [vmem:[%s1 + $0x2e0] sm:$0xff]
        %v466 = vld [vmem:[%s1 + $0x2e8] sm:$0xff]
        %v467 = vld [vmem:[%s1 + $0x2f0] sm:$0xff]
        %v468 = vld [vmem:[%s1 + $0x2f8] sm:$0xff]
        %v469 = vld [vmem:[%s1 + $0x300] sm:$0xff]
        %v470 = vld [vmem:[%s1 + $0x308] sm:$0xff]
        %v471 = vld [vmem:[%s1 + $0x310] sm:$0xff]
        %v472 = vld [vmem:[%s1 + $0x318] sm:$0xff]
        %v473 = vld [vmem:[%s1 + $0x320] sm:$0xff]
        %v474 = vld [vmem:[%s1 + $0x328] sm:$0xff]
        %v475 = vld [vmem:[%s1 + $0x330] sm:$0xff]
        %v476 = vld [vmem:[%s1 + $0x338] sm:$0xff]
        %v477 = vld [vmem:[%s1 + $0x340] sm:$0xff]
        %v478 = vld [vmem:[%s1 + $0x348] sm:$0xff]
        %v479 = vld [vmem:[%s1 + $0x350] sm:$0xff]
        %v480 = vld [vmem:[%s1 + $0x358] sm:$0xff]
        %v481 = vld [vmem:[%s1 + $0x360] sm:$0xff]
        %v482 = vld [vmem:[%s1 + $0x368] sm:$0xff]
        %v483 = vld [vmem:[%s1 + $0x370] sm:$0xff]
        %v484 = vld [vmem:[%s1 + $0x378] sm:$0xf]
        %v485 = vld [vmem:[%s1 + $0x380] sm:$0xf]
        %v486 = vld [vmem:[%s1 + $0x388] sm:$0xf]
        %v487 = vld [vmem:[%s2] sm:$0x7]
        %v489 = vlaneseq
        %v490 = vshrl.u32 %v489, 7
        %v491 = vsub.s32 0, %v490
        %v492 = vrot.slane %v487, %v491
        %v493 = vlaneseq
        %v494 = vshrl.u32 %v493, 7
        %v495 = vsub.s32 1, %v494
        %v496 = vrot.slane %v487, %v495
        %v497 = vlaneseq
        %v498 = vshrl.u32 %v497, 7
        %v499 = vsub.s32 2, %v498
        %v500 = vrot.slane %v487, %v499
        %vm504 = vcmask 359424
        %v506 = vsel %vm504, %v327, 0
        %v509 = vsel %vm504, %v330, 0
        %v512 = vsel %vm504, %v333, 0
        %v515 = vsel %vm504, %v336, 0
        %v518 = vsel %vm504, %v339, 0
        %v521 = vsel %vm504, %v342, 0
        %v524 = vsel %vm504, %v345, 0
        %v527 = vsel %vm504, %v348, 0
        %v530 = vsel %vm504, %v351, 0
        %v533 = vsel %vm504, %v354, 0
        %v536 = vsel %vm504, %v357, 0
        %v539 = vsel %vm504, %v360, 0
        %v542 = vsel %vm504, %v363, 0
        %v545 = vsel %vm504, %v366, 0
        %v548 = vsel %vm504, %v369, 0
        %v551 = vsel %vm504, %v372, 0
        %vm553 = vcmask 1043456
        %v555 = vsel %vm553, %v484, 0
        %v558 = vsel %vm553, %v485, 0
        %v561 = vsel %vm553, %v486, 0
        %563 = vmatprep.subr.mxu0 %v374
        %564 = vmatpush1.msra.mxu0 %v373
        %565 = vmatprep.subr.mxu0 %v377
        %566 = vmatpush1.msra.mxu0 %v376
        %567 = vmatprep.subr.mxu0 %v380
        %568 = vmatpush1.msra.mxu0 %v379
        %569 = vmatprep.subr.mxu0 %v383
        %570 = vmatpush1.msra.mxu0 %v382
        %571 = vmatprep.subr.mxu0 %v386
        %572 = vmatpush1.msra.mxu0 %v385
        %573 = vmatprep.subr.mxu0 %v389
        %574 = vmatpush1.msra.mxu0 %v388
        %575 = vmatprep.subr.mxu0 %v392
        %576 = vmatpush1.msra.mxu0 %v391
        %577 = vmatprep.subr.mxu0 %v395
        %578 = vmatpush1.msra.mxu0 %v394
        %579 = vmatprep.subr.mxu0 %v398
        %580 = vmatpush1.msra.mxu0 %v397
        %581 = vmatprep.subr.mxu0 %v401
        %582 = vmatpush1.msra.mxu0 %v400
        %583 = vmatprep.subr.mxu0 %v404
        %584 = vmatpush1.msra.mxu0 %v403
        %585 = vmatprep.subr.mxu0 %v407
        %586 = vmatpush1.msra.mxu0 %v406
        %587 = vmatprep.subr.mxu0 %v410
        %588 = vmatpush1.msra.mxu0 %v409
        %589 = vmatprep.subr.mxu0 %v413
        %590 = vmatpush1.msra.mxu0 %v412
        %591 = vmatprep.subr.mxu0 %v416
        %592 = vmatpush1.msra.mxu0 %v415
        %593 = vmatprep.subr.mxu0 %v419
        %594 = vmatpush1.msra.mxu0 %v418
        %595 = vmatprep.subr.mxu0 %v422
        %596 = vmatpush1.msra.mxu0 %v421
        %597 = vmatprep.subr.mxu0 %v425
        %598 = vmatpush1.msra.mxu0 %v424
        %599 = vmatprep.subr.mxu0 %v428
        %600 = vmatpush1.msra.mxu0 %v427
        %601 = vmatprep.subr.mxu0 %v431
        %602 = vmatpush1.msra.mxu0 %v430
        %603 = vmatprep.subr.mxu0 %v434
        %604 = vmatpush1.msra.mxu0 %v433
        %605 = vmatprep.subr.mxu0 %v437
        %606 = vmatpush1.msra.mxu0 %v436
        %607 = vmatprep.subr.mxu0 %v440
        %608 = vmatpush1.msra.mxu0 %v439
        %609 = vmatprep.subr.mxu0 %v443
        %610 = vmatpush1.msra.mxu0 %v442
        %611 = vmatprep.subr.mxu0 %v446
        %612 = vmatpush1.msra.mxu0 %v445
        %613 = vmatprep.subr.mxu0 %v449
        %614 = vmatpush1.msra.mxu0 %v448
        %615 = vmatprep.subr.mxu0 %v452
        %616 = vmatpush1.msra.mxu0 %v451
        %617 = vmatprep.subr.mxu0 %v455
        %618 = vmatpush1.msra.mxu0 %v454
        %619 = vmatprep.subr.mxu0 %v458
        %620 = vmatpush1.msra.mxu0 %v457
        %621 = vmatprep.subr.mxu0 %v461
        %622 = vmatpush1.msra.mxu0 %v460
        %623 = vmatprep.subr.mxu0 %v464
        %624 = vmatpush1.msra.mxu0 %v463
        %625 = vmatprep.subr.mxu0 %v467
        %626 = vmatpush1.msra.mxu0 %v466
        %627 = vmatprep.mubr.f32.mxu0 %v326
        %628 = vmatmul.mubr.f32.gmra.mrb[0].mxu0 %v325
        %v629 = vpop.f32.mrb[0].mxu0
        %v630 = vadd.f32 %v492, %v629
        %v631 = vpop.f32.mrb[0].mxu0
        %v632 = vadd.f32 %v496, %v631
        %633 = vmatprep.mubr.f32.mxu0 %v329
        %634 = vmatmul.mubr.f32.gmra.mrb[0].mxu0 %v328
        %v635 = vpop.f32.mrb[0].mxu0
        %v636 = vadd.f32 %v492, %v635
        %v637 = vpop.f32.mrb[0].mxu0
        %v638 = vadd.f32 %v496, %v637
        %639 = vmatprep.mubr.f32.mxu0 %v332
        %640 = vmatmul.mubr.f32.gmra.mrb[0].mxu0 %v331
        %v641 = vpop.f32.mrb[0].mxu0
        %v642 = vadd.f32 %v492, %v641
        %v643 = vpop.f32.mrb[0].mxu0
        %v644 = vadd.f32 %v496, %v643
        %645 = vmatprep.mubr.f32.mxu0 %v335
        %646 = vmatmul.mubr.f32.gmra.mrb[0].mxu0 %v334
        %v647 = vpop.f32.mrb[0].mxu0
        %v648 = vadd.f32 %v492, %v647
        %v649 = vpop.f32.mrb[0].mxu0
        %v650 = vadd.f32 %v496, %v649
        %651 = vmatprep.mubr.f32.mxu0 %v338
        %652 = vmatmul.mubr.f32.gmra.mrb[0].mxu0 %v337
        %v653 = vpop.f32.mrb[0].mxu0
        %v654 = vadd.f32 %v492, %v653
        %v655 = vpop.f32.mrb[0].mxu0
        %v656 = vadd.f32 %v496, %v655
        %657 = vmatprep.mubr.f32.mxu0 %v341
        %658 = vmatmul.mubr.f32.gmra.mrb[0].mxu0 %v340
        %v659 = vpop.f32.mrb[0].mxu0
        %v660 = vadd.f32 %v492, %v659
        %v661 = vpop.f32.mrb[0].mxu0
        %v662 = vadd.f32 %v496, %v661
        %663 = vmatprep.mubr.f32.mxu0 %v344
        %664 = vmatmul.mubr.f32.gmra.mrb[0].mxu0 %v343
        %v665 = vpop.f32.mrb[0].mxu0
        %v666 = vadd.f32 %v492, %v665
        %v667 = vpop.f32.mrb[0].mxu0
        %v668 = vadd.f32 %v496, %v667
        %669 = vmatprep.mubr.f32.mxu0 %v347
        %670 = vmatmul.mubr.f32.gmra.mrb[0].mxu0 %v346
        %v671 = vpop.f32.mrb[0].mxu0
        %v672 = vadd.f32 %v492, %v671
        %v673 = vpop.f32.mrb[0].mxu0
        %v674 = vadd.f32 %v496, %v673
        %675 = vmatprep.mubr.f32.mxu0 %v350
        %676 = vmatmul.mubr.f32.gmra.mrb[0].mxu0 %v349
        %v677 = vpop.f32.mrb[0].mxu0
        %v678 = vadd.f32 %v492, %v677
        %v679 = vpop.f32.mrb[0].mxu0
        %v680 = vadd.f32 %v496, %v679
        %681 = vmatprep.mubr.f32.mxu0 %v353
        %682 = vmatmul.mubr.f32.gmra.mrb[0].mxu0 %v352
        %v683 = vpop.f32.mrb[0].mxu0
        %v684 = vadd.f32 %v492, %v683
        %v685 = vpop.f32.mrb[0].mxu0
        %v686 = vadd.f32 %v496, %v685
        %687 = vmatprep.mubr.f32.mxu0 %v356
        %688 = vmatmul.mubr.f32.gmra.mrb[0].mxu0 %v355
        %v689 = vpop.f32.mrb[0].mxu0
        %v690 = vadd.f32 %v492, %v689
        %v691 = vpop.f32.mrb[0].mxu0
        %v692 = vadd.f32 %v496, %v691
        %693 = vmatprep.mubr.f32.mxu0 %v359
        %694 = vmatmul.mubr.f32.gmra.mrb[0].mxu0 %v358
        %v695 = vpop.f32.mrb[0].mxu0
        %v696 = vadd.f32 %v492, %v695
        %v697 = vpop.f32.mrb[0].mxu0
        %v698 = vadd.f32 %v496, %v697
        %699 = vmatprep.mubr.f32.mxu0 %v362
        %700 = vmatmul.mubr.f32.gmra.mrb[0].mxu0 %v361
        %v701 = vpop.f32.mrb[0].mxu0
        %v702 = vadd.f32 %v492, %v701
        %v703 = vpop.f32.mrb[0].mxu0
        %v704 = vadd.f32 %v496, %v703
        %705 = vmatprep.mubr.f32.mxu0 %v365
        %706 = vmatmul.mubr.f32.gmra.mrb[0].mxu0 %v364
        %v707 = vpop.f32.mrb[0].mxu0
        %v708 = vadd.f32 %v492, %v707
        %v709 = vpop.f32.mrb[0].mxu0
        %v710 = vadd.f32 %v496, %v709
        %711 = vmatprep.mubr.f32.mxu0 %v368
        %712 = vmatmul.mubr.f32.gmra.mrb[0].mxu0 %v367
        %v713 = vpop.f32.mrb[0].mxu0
        %v714 = vadd.f32 %v492, %v713
        %v715 = vpop.f32.mrb[0].mxu0
        %v716 = vadd.f32 %v496, %v715
        %717 = vmatprep.mubr.f32.mxu0 %v371
        %718 = vmatmul.mubr.f32.gmra.mrb[0].mxu0 %v370
        %v719 = vpop.f32.mrb[0].mxu0
        %v720 = vadd.f32 %v492, %v719
        %v721 = vpop.f32.mrb[0].mxu0
        %v722 = vadd.f32 %v496, %v721
        %723 = vdwg.mxu0
        %724 = vmatprep.subr.mxu0 %v470
        %725 = vmatpush1.msra.mxu0 %v469
        %726 = vmatprep.subr.mxu0 %v473
        %727 = vmatpush1.msra.mxu0 %v472
        %728 = vmatprep.subr.mxu0 %v476
        %729 = vmatpush1.msra.mxu0 %v475
        %730 = vmatprep.subr.mxu0 %v479
        %731 = vmatpush1.msra.mxu0 %v478
        %732 = vmatprep.subr.mxu0 %v482
        %733 = vmatpush1.msra.mxu0 %v481
        %734 = vmatprep.subr.mxu0 %v558
        %735 = vmatpush1.msra.mxu0 %v555
        %736 = vmatprep.subr.mxu0 0.0
        %737 = vmatpush1.msra.mxu0 0.0
        %738 = vmatprep.subr.mxu0 0.0
        %739 = vmatpush1.msra.mxu0 0.0
        %740 = vmatprep.subr.mxu0 0.0
        %741 = vmatpush1.msra.mxu0 0.0
        %742 = vmatprep.subr.mxu0 0.0
        %743 = vmatpush1.msra.mxu0 0.0
        %744 = vmatprep.subr.mxu0 0.0
        %745 = vmatpush1.msra.mxu0 0.0
        %746 = vmatprep.subr.mxu0 0.0
        %747 = vmatpush1.msra.mxu0 0.0
        %748 = vmatprep.subr.mxu0 0.0
        %749 = vmatpush1.msra.mxu0 0.0
        %750 = vmatprep.subr.mxu0 0.0
        %751 = vmatpush1.msra.mxu0 0.0
        %752 = vmatprep.subr.mxu0 0.0
        %753 = vmatpush1.msra.mxu0 0.0
        %754 = vmatprep.subr.mxu0 0.0
        %755 = vmatpush1.msra.mxu0 0.0
        %756 = vmatprep.subr.mxu0 0.0
        %757 = vmatpush1.msra.mxu0 0.0
        %758 = vmatprep.subr.mxu0 0.0
        %759 = vmatpush1.msra.mxu0 0.0
        %760 = vmatprep.subr.mxu0 0.0
        %761 = vmatpush1.msra.mxu0 0.0
        %762 = vmatprep.subr.mxu0 0.0
        %763 = vmatpush1.msra.mxu0 0.0
        %764 = vmatprep.subr.mxu0 0.0
        %765 = vmatpush1.msra.mxu0 0.0
        %766 = vmatprep.subr.mxu0 0.0
        %767 = vmatpush1.msra.mxu0 0.0
        %768 = vmatprep.subr.mxu0 0.0
        %769 = vmatpush1.msra.mxu0 0.0
        %770 = vmatprep.subr.mxu0 0.0
        %771 = vmatpush1.msra.mxu0 0.0
        %772 = vmatprep.subr.mxu0 0.0
        %773 = vmatpush1.msra.mxu0 0.0
        %774 = vmatprep.subr.mxu0 0.0
        %775 = vmatpush1.msra.mxu0 0.0
        %776 = vmatprep.subr.mxu0 0.0
        %777 = vmatpush1.msra.mxu0 0.0
        %778 = vmatprep.subr.mxu0 0.0
        %779 = vmatpush1.msra.mxu0 0.0
        %780 = vmatprep.subr.mxu0 0.0
        %781 = vmatpush1.msra.mxu0 0.0
        %782 = vmatprep.subr.mxu0 0.0
        %783 = vmatpush1.msra.mxu0 0.0
        %784 = vmatprep.subr.mxu0 0.0
        %785 = vmatpush1.msra.mxu0 0.0
        %786 = vmatprep.subr.mxu0 0.0
        %787 = vmatpush1.msra.mxu0 0.0
        %788 = vmatprep.mubr.f32.mxu0 0.0
        %789 = vmatmul.mubr.f32.gmra.mrb[0].mxu0 %v506
        %v790 = vpop.f32.mrb[0].mxu0
        %v791 = vadd.f32 %v630, %v790
        %v792 = vpop.f32.mrb[0].mxu0
        %v793 = vadd.f32 %v632, %v792
        %794 = vmatprep.mubr.f32.mxu0 0.0
        %795 = vmatmul.mubr.f32.gmra.mrb[0].mxu0 %v509
        %v796 = vpop.f32.mrb[0].mxu0
        %v797 = vadd.f32 %v636, %v796
        %v798 = vpop.f32.mrb[0].mxu0
        %v799 = vadd.f32 %v638, %v798
        %800 = vmatprep.mubr.f32.mxu0 0.0
        %801 = vmatmul.mubr.f32.gmra.mrb[0].mxu0 %v512
        %v802 = vpop.f32.mrb[0].mxu0
        %v803 = vadd.f32 %v642, %v802
        %v804 = vpop.f32.mrb[0].mxu0
        %v805 = vadd.f32 %v644, %v804
        %806 = vmatprep.mubr.f32.mxu0 0.0
        %807 = vmatmul.mubr.f32.gmra.mrb[0].mxu0 %v515
        %v808 = vpop.f32.mrb[0].mxu0
        %v809 = vadd.f32 %v648, %v808
        %v810 = vpop.f32.mrb[0].mxu0
        %v811 = vadd.f32 %v650, %v810
        %812 = vmatprep.mubr.f32.mxu0 0.0
        %813 = vmatmul.mubr.f32.gmra.mrb[0].mxu0 %v518
        %v814 = vpop.f32.mrb[0].mxu0
        %v815 = vadd.f32 %v654, %v814
        %v816 = vpop.f32.mrb[0].mxu0
        %v817 = vadd.f32 %v656, %v816
        %818 = vmatprep.mubr.f32.mxu0 0.0
        %819 = vmatmul.mubr.f32.gmra.mrb[0].mxu0 %v521
        %v820 = vpop.f32.mrb[0].mxu0
        %v821 = vadd.f32 %v660, %v820
        %v822 = vpop.f32.mrb[0].mxu0
        %v823 = vadd.f32 %v662, %v822
        %824 = vmatprep.mubr.f32.mxu0 0.0
        %825 = vmatmul.mubr.f32.gmra.mrb[0].mxu0 %v524
        %v826 = vpop.f32.mrb[0].mxu0
        %v827 = vadd.f32 %v666, %v826
        %v828 = vpop.f32.mrb[0].mxu0
        %v829 = vadd.f32 %v668, %v828
        %830 = vmatprep.mubr.f32.mxu0 0.0
        %831 = vmatmul.mubr.f32.gmra.mrb[0].mxu0 %v527
        %v832 = vpop.f32.mrb[0].mxu0
        %v833 = vadd.f32 %v672, %v832
        %v834 = vpop.f32.mrb[0].mxu0
        %v835 = vadd.f32 %v674, %v834
        %836 = vmatprep.mubr.f32.mxu0 0.0
        %837 = vmatmul.mubr.f32.gmra.mrb[0].mxu0 %v530
        %v838 = vpop.f32.mrb[0].mxu0
        %v839 = vadd.f32 %v678, %v838
        %v840 = vpop.f32.mrb[0].mxu0
        %v841 = vadd.f32 %v680, %v840
        %842 = vmatprep.mubr.f32.mxu0 0.0
        %843 = vmatmul.mubr.f32.gmra.mrb[0].mxu0 %v533
        %v844 = vpop.f32.mrb[0].mxu0
        %v845 = vadd.f32 %v684, %v844
        %v846 = vpop.f32.mrb[0].mxu0
        %v847 = vadd.f32 %v686, %v846
        %848 = vmatprep.mubr.f32.mxu0 0.0
        %849 = vmatmul.mubr.f32.gmra.mrb[0].mxu0 %v536
        %v850 = vpop.f32.mrb[0].mxu0
        %v851 = vadd.f32 %v690, %v850
        %v852 = vpop.f32.mrb[0].mxu0
        %v853 = vadd.f32 %v692, %v852
        %854 = vmatprep.mubr.f32.mxu0 0.0
        %855 = vmatmul.mubr.f32.gmra.mrb[0].mxu0 %v539
        %v856 = vpop.f32.mrb[0].mxu0
        %v857 = vadd.f32 %v696, %v856
        %v858 = vpop.f32.mrb[0].mxu0
        %v859 = vadd.f32 %v698, %v858
        %860 = vmatprep.mubr.f32.mxu0 0.0
        %861 = vmatmul.mubr.f32.gmra.mrb[0].mxu0 %v542
        %v862 = vpop.f32.mrb[0].mxu0
        %v863 = vadd.f32 %v702, %v862
        %v864 = vpop.f32.mrb[0].mxu0
        %v865 = vadd.f32 %v704, %v864
        %866 = vmatprep.mubr.f32.mxu0 0.0
        %867 = vmatmul.mubr.f32.gmra.mrb[0].mxu0 %v545
        %v868 = vpop.f32.mrb[0].mxu0
        %v869 = vadd.f32 %v708, %v868
        %v870 = vpop.f32.mrb[0].mxu0
        %v871 = vadd.f32 %v710, %v870
        %872 = vmatprep.mubr.f32.mxu0 0.0
        %873 = vmatmul.mubr.f32.gmra.mrb[0].mxu0 %v548
        %v874 = vpop.f32.mrb[0].mxu0
        %v875 = vadd.f32 %v714, %v874
        %v876 = vpop.f32.mrb[0].mxu0
        %v877 = vadd.f32 %v716, %v876
        %878 = vmatprep.mubr.f32.mxu0 0.0
        %879 = vmatmul.mubr.f32.gmra.mrb[0].mxu0 %v551
        %v880 = vpop.f32.mrb[0].mxu0
        %v881 = vadd.f32 %v720, %v880
        %v882 = vpop.f32.mrb[0].mxu0
        %v883 = vadd.f32 %v722, %v882
        %884 = vdwg.mxu0
        %885 = vmatprep.subr.mxu0 0.0
        %886 = vmatpush1.msra.mxu0 %v375
        %887 = vmatprep.subr.mxu0 0.0
        %888 = vmatpush1.msra.mxu0 %v378
        %889 = vmatprep.subr.mxu0 0.0
        %890 = vmatpush1.msra.mxu0 %v381
        %891 = vmatprep.subr.mxu0 0.0
        %892 = vmatpush1.msra.mxu0 %v384
        %893 = vmatprep.subr.mxu0 0.0
        %894 = vmatpush1.msra.mxu0 %v387
        %895 = vmatprep.subr.mxu0 0.0
        %896 = vmatpush1.msra.mxu0 %v390
        %897 = vmatprep.subr.mxu0 0.0
        %898 = vmatpush1.msra.mxu0 %v393
        %899 = vmatprep.subr.mxu0 0.0
        %900 = vmatpush1.msra.mxu0 %v396
        %901 = vmatprep.subr.mxu0 0.0
        %902 = vmatpush1.msra.mxu0 %v399
        %903 = vmatprep.subr.mxu0 0.0
        %904 = vmatpush1.msra.mxu0 %v402
        %905 = vmatprep.subr.mxu0 0.0
        %906 = vmatpush1.msra.mxu0 %v405
        %907 = vmatprep.subr.mxu0 0.0
        %908 = vmatpush1.msra.mxu0 %v408
        %909 = vmatprep.subr.mxu0 0.0
        %910 = vmatpush1.msra.mxu0 %v411
        %911 = vmatprep.subr.mxu0 0.0
        %912 = vmatpush1.msra.mxu0 %v414
        %913 = vmatprep.subr.mxu0 0.0
        %914 = vmatpush1.msra.mxu0 %v417
        %915 = vmatprep.subr.mxu0 0.0
        %916 = vmatpush1.msra.mxu0 %v420
        %917 = vmatprep.subr.mxu0 0.0
        %918 = vmatpush1.msra.mxu0 %v423
        %919 = vmatprep.subr.mxu0 0.0
        %920 = vmatpush1.msra.mxu0 %v426
        %921 = vmatprep.subr.mxu0 0.0
        %922 = vmatpush1.msra.mxu0 %v429
        %923 = vmatprep.subr.mxu0 0.0
        %924 = vmatpush1.msra.mxu0 %v432
        %925 = vmatprep.subr.mxu0 0.0
        %926 = vmatpush1.msra.mxu0 %v435
        %927 = vmatprep.subr.mxu0 0.0
        %928 = vmatpush1.msra.mxu0 %v438
        %929 = vmatprep.subr.mxu0 0.0
        %930 = vmatpush1.msra.mxu0 %v441
        %931 = vmatprep.subr.mxu0 0.0
        %932 = vmatpush1.msra.mxu0 %v444
        %933 = vmatprep.subr.mxu0 0.0
        %934 = vmatpush1.msra.mxu0 %v447
        %935 = vmatprep.subr.mxu0 0.0
        %936 = vmatpush1.msra.mxu0 %v450
        %937 = vmatprep.subr.mxu0 0.0
        %938 = vmatpush1.msra.mxu0 %v453
        %939 = vmatprep.subr.mxu0 0.0
        %940 = vmatpush1.msra.mxu0 %v456
        %941 = vmatprep.subr.mxu0 0.0
        %942 = vmatpush1.msra.mxu0 %v459
        %943 = vmatprep.subr.mxu0 0.0
        %944 = vmatpush1.msra.mxu0 %v462
        %945 = vmatprep.subr.mxu0 0.0
        %946 = vmatpush1.msra.mxu0 %v465
        %947 = vmatprep.subr.mxu0 0.0
        %948 = vmatpush1.msra.mxu0 %v468
        %949 = vmatprep.mubr.f32.mxu0 %v326
        %950 = vmatmul.mubr.f32.gmra.mrb[0].mxu0 %v325
        %v951 = vpop.f32.mrb[0].mxu0
        %v952 = vadd.f32 %v500, %v951
        %v953 = vpop.f32.mrb[0].mxu0
        %954 = vmatprep.mubr.f32.mxu0 %v329
        %955 = vmatmul.mubr.f32.gmra.mrb[0].mxu0 %v328
        %v956 = vpop.f32.mrb[0].mxu0
        %v957 = vadd.f32 %v500, %v956
        %v958 = vpop.f32.mrb[0].mxu0
        %959 = vmatprep.mubr.f32.mxu0 %v332
        %960 = vmatmul.mubr.f32.gmra.mrb[0].mxu0 %v331
        %v961 = vpop.f32.mrb[0].mxu0
        %v962 = vadd.f32 %v500, %v961
        %v963 = vpop.f32.mrb[0].mxu0
        %964 = vmatprep.mubr.f32.mxu0 %v335
        %965 = vmatmul.mubr.f32.gmra.mrb[0].mxu0 %v334
        %v966 = vpop.f32.mrb[0].mxu0
        %v967 = vadd.f32 %v500, %v966
        %v968 = vpop.f32.mrb[0].mxu0
        %969 = vmatprep.mubr.f32.mxu0 %v338
        %970 = vmatmul.mubr.f32.gmra.mrb[0].mxu0 %v337
        %v971 = vpop.f32.mrb[0].mxu0
        %v972 = vadd.f32 %v500, %v971
        %v973 = vpop.f32.mrb[0].mxu0
        %974 = vmatprep.mubr.f32.mxu0 %v341
        %975 = vmatmul.mubr.f32.gmra.mrb[0].mxu0 %v340
        %v976 = vpop.f32.mrb[0].mxu0
        %v977 = vadd.f32 %v500, %v976
        %v978 = vpop.f32.mrb[0].mxu0
        %979 = vmatprep.mubr.f32.mxu0 %v344
        %980 = vmatmul.mubr.f32.gmra.mrb[0].mxu0 %v343
        %v981 = vpop.f32.mrb[0].mxu0
        %v982 = vadd.f32 %v500, %v981
        %v983 = vpop.f32.mrb[0].mxu0
        %984 = vmatprep.mubr.f32.mxu0 %v347
        %985 = vmatmul.mubr.f32.gmra.mrb[0].mxu0 %v346
        %v986 = vpop.f32.mrb[0].mxu0
        %v987 = vadd.f32 %v500, %v986
        %v988 = vpop.f32.mrb[0].mxu0
        %989 = vmatprep.mubr.f32.mxu0 %v350
        %990 = vmatmul.mubr.f32.gmra.mrb[0].mxu0 %v349
        %v991 = vpop.f32.mrb[0].mxu0
        %v992 = vadd.f32 %v500, %v991
        %v993 = vpop.f32.mrb[0].mxu0
        %994 = vmatprep.mubr.f32.mxu0 %v353
        %995 = vmatmul.mubr.f32.gmra.mrb[0].mxu0 %v352
        %v996 = vpop.f32.mrb[0].mxu0
        %v997 = vadd.f32 %v500, %v996
        %v998 = vpop.f32.mrb[0].mxu0
        %999 = vmatprep.mubr.f32.mxu0 %v356
        %1000 = vmatmul.mubr.f32.gmra.mrb[0].mxu0 %v355
        %v1001 = vpop.f32.mrb[0].mxu0
        %v1002 = vadd.f32 %v500, %v1001
        %v1003 = vpop.f32.mrb[0].mxu0
        %1004 = vmatprep.mubr.f32.mxu0 %v359
        %1005 = vmatmul.mubr.f32.gmra.mrb[0].mxu0 %v358
        %v1006 = vpop.f32.mrb[0].mxu0
        %v1007 = vadd.f32 %v500, %v1006
        %v1008 = vpop.f32.mrb[0].mxu0
        %1009 = vmatprep.mubr.f32.mxu0 %v362
        %1010 = vmatmul.mubr.f32.gmra.mrb[0].mxu0 %v361
        %v1011 = vpop.f32.mrb[0].mxu0
        %v1012 = vadd.f32 %v500, %v1011
        %v1013 = vpop.f32.mrb[0].mxu0
        %1014 = vmatprep.mubr.f32.mxu0 %v365
        %1015 = vmatmul.mubr.f32.gmra.mrb[0].mxu0 %v364
        %v1016 = vpop.f32.mrb[0].mxu0
        %v1017 = vadd.f32 %v500, %v1016
        %v1018 = vpop.f32.mrb[0].mxu0
        %1019 = vmatprep.mubr.f32.mxu0 %v368
        %1020 = vmatmul.mubr.f32.gmra.mrb[0].mxu0 %v367
        %v1021 = vpop.f32.mrb[0].mxu0
        %v1022 = vadd.f32 %v500, %v1021
        %v1023 = vpop.f32.mrb[0].mxu0
        %1024 = vmatprep.mubr.f32.mxu0 %v371
        %1025 = vmatmul.mubr.f32.gmra.mrb[0].mxu0 %v370
        %v1026 = vpop.f32.mrb[0].mxu0
        %v1027 = vadd.f32 %v500, %v1026
        %v1028 = vpop.f32.mrb[0].mxu0
        %1029 = vdwg.mxu0
        %1030 = vmatprep.subr.mxu0 0.0
        %1031 = vmatpush1.msra.mxu0 %v471
        %1032 = vmatprep.subr.mxu0 0.0
        %1033 = vmatpush1.msra.mxu0 %v474
        %1034 = vmatprep.subr.mxu0 0.0
        %1035 = vmatpush1.msra.mxu0 %v477
        %1036 = vmatprep.subr.mxu0 0.0
        %1037 = vmatpush1.msra.mxu0 %v480
        %1038 = vmatprep.subr.mxu0 0.0
        %1039 = vmatpush1.msra.mxu0 %v483
        %1040 = vmatprep.subr.mxu0 0.0
        %1041 = vmatpush1.msra.mxu0 %v561
        %1042 = vmatprep.subr.mxu0 0.0
        %1043 = vmatpush1.msra.mxu0 0.0
        %1044 = vmatprep.subr.mxu0 0.0
        %1045 = vmatpush1.msra.mxu0 0.0
        %1046 = vmatprep.subr.mxu0 0.0
        %1047 = vmatpush1.msra.mxu0 0.0
        %1048 = vmatprep.subr.mxu0 0.0
        %1049 = vmatpush1.msra.mxu0 0.0
        %1050 = vmatprep.subr.mxu0 0.0
        %1051 = vmatpush1.msra.mxu0 0.0
        %1052 = vmatprep.subr.mxu0 0.0
        %1053 = vmatpush1.msra.mxu0 0.0
        %1054 = vmatprep.subr.mxu0 0.0
        %1055 = vmatpush1.msra.mxu0 0.0
        %1056 = vmatprep.subr.mxu0 0.0
        %1057 = vmatpush1.msra.mxu0 0.0
        %1058 = vmatprep.subr.mxu0 0.0
        %1059 = vmatpush1.msra.mxu0 0.0
        %1060 = vmatprep.subr.mxu0 0.0
        %1061 = vmatpush1.msra.mxu0 0.0
        %1062 = vmatprep.subr.mxu0 0.0
        %1063 = vmatpush1.msra.mxu0 0.0
        %1064 = vmatprep.subr.mxu0 0.0
        %1065 = vmatpush1.msra.mxu0 0.0
        %1066 = vmatprep.subr.mxu0 0.0
        %1067 = vmatpush1.msra.mxu0 0.0
        %1068 = vmatprep.subr.mxu0 0.0
        %1069 = vmatpush1.msra.mxu0 0.0
        %1070 = vmatprep.subr.mxu0 0.0
        %1071 = vmatpush1.msra.mxu0 0.0
        %1072 = vmatprep.subr.mxu0 0.0
        %1073 = vmatpush1.msra.mxu0 0.0
        %1074 = vmatprep.subr.mxu0 0.0
        %1075 = vmatpush1.msra.mxu0 0.0
        %1076 = vmatprep.subr.mxu0 0.0
        %1077 = vmatpush1.msra.mxu0 0.0
        %1078 = vmatprep.subr.mxu0 0.0
        %1079 = vmatpush1.msra.mxu0 0.0
        %1080 = vmatprep.subr.mxu0 0.0
        %1081 = vmatpush1.msra.mxu0 0.0
        %1082 = vmatprep.subr.mxu0 0.0
        %1083 = vmatpush1.msra.mxu0 0.0
        %1084 = vmatprep.subr.mxu0 0.0
        %1085 = vmatpush1.msra.mxu0 0.0
        %1086 = vmatprep.subr.mxu0 0.0
        %1087 = vmatpush1.msra.mxu0 0.0
        %1088 = vmatprep.subr.mxu0 0.0
        %1089 = vmatpush1.msra.mxu0 0.0
        %1090 = vmatprep.subr.mxu0 0.0
        %1091 = vmatpush1.msra.mxu0 0.0
        %1092 = vmatprep.subr.mxu0 0.0
        %1093 = vmatpush1.msra.mxu0 0.0
        %1094 = vmatprep.mubr.f32.mxu0 0.0
        %1095 = vmatmul.mubr.f32.gmra.mrb[0].mxu0 %v506
        %v1096 = vpop.f32.mrb[0].mxu0
        %v1097 = vadd.f32 %v952, %v1096
        %v1098 = vpop.f32.mrb[0].mxu0
        %1099 = vmatprep.mubr.f32.mxu0 0.0
        %1100 = vmatmul.mubr.f32.gmra.mrb[0].mxu0 %v509
        %v1101 = vpop.f32.mrb[0].mxu0
        %v1102 = vadd.f32 %v957, %v1101
        %v1103 = vpop.f32.mrb[0].mxu0
        %1104 = vmatprep.mubr.f32.mxu0 0.0
        %1105 = vmatmul.mubr.f32.gmra.mrb[0].mxu0 %v512
        %v1106 = vpop.f32.mrb[0].mxu0
        %v1107 = vadd.f32 %v962, %v1106
        %v1108 = vpop.f32.mrb[0].mxu0
        %1109 = vmatprep.mubr.f32.mxu0 0.0
        %1110 = vmatmul.mubr.f32.gmra.mrb[0].mxu0 %v515
        %v1111 = vpop.f32.mrb[0].mxu0
        %v1112 = vadd.f32 %v967, %v1111
        %v1113 = vpop.f32.mrb[0].mxu0
        %1114 = vmatprep.mubr.f32.mxu0 0.0
        %1115 = vmatmul.mubr.f32.gmra.mrb[0].mxu0 %v518
        %v1116 = vpop.f32.mrb[0].mxu0
        %v1117 = vadd.f32 %v972, %v1116
        %v1118 = vpop.f32.mrb[0].mxu0
        %1119 = vmatprep.mubr.f32.mxu0 0.0
        %1120 = vmatmul.mubr.f32.gmra.mrb[0].mxu0 %v521
        %v1121 = vpop.f32.mrb[0].mxu0
        %v1122 = vadd.f32 %v977, %v1121
        %v1123 = vpop.f32.mrb[0].mxu0
        %1124 = vmatprep.mubr.f32.mxu0 0.0
        %1125 = vmatmul.mubr.f32.gmra.mrb[0].mxu0 %v524
        %v1126 = vpop.f32.mrb[0].mxu0
        %v1127 = vadd.f32 %v982, %v1126
        %v1128 = vpop.f32.mrb[0].mxu0
        %1129 = vmatprep.mubr.f32.mxu0 0.0
        %1130 = vmatmul.mubr.f32.gmra.mrb[0].mxu0 %v527
        %v1131 = vpop.f32.mrb[0].mxu0
        %v1132 = vadd.f32 %v987, %v1131
        %v1133 = vpop.f32.mrb[0].mxu0
        %1134 = vmatprep.mubr.f32.mxu0 0.0
        %1135 = vmatmul.mubr.f32.gmra.mrb[0].mxu0 %v530
        %v1136 = vpop.f32.mrb[0].mxu0
        %v1137 = vadd.f32 %v992, %v1136
        %v1138 = vpop.f32.mrb[0].mxu0
        %1139 = vmatprep.mubr.f32.mxu0 0.0
        %1140 = vmatmul.mubr.f32.gmra.mrb[0].mxu0 %v533
        %v1141 = vpop.f32.mrb[0].mxu0
        %v1142 = vadd.f32 %v997, %v1141
        %v1143 = vpop.f32.mrb[0].mxu0
        %1144 = vmatprep.mubr.f32.mxu0 0.0
        %1145 = vmatmul.mubr.f32.gmra.mrb[0].mxu0 %v536
        %v1146 = vpop.f32.mrb[0].mxu0
        %v1147 = vadd.f32 %v1002, %v1146
        %v1148 = vpop.f32.mrb[0].mxu0
        %1149 = vmatprep.mubr.f32.mxu0 0.0
        %1150 = vmatmul.mubr.f32.gmra.mrb[0].mxu0 %v539
        %v1151 = vpop.f32.mrb[0].mxu0
        %v1152 = vadd.f32 %v1007, %v1151
        %v1153 = vpop.f32.mrb[0].mxu0
        %1154 = vmatprep.mubr.f32.mxu0 0.0
        %1155 = vmatmul.mubr.f32.gmra.mrb[0].mxu0 %v542
        %v1156 = vpop.f32.mrb[0].mxu0
        %v1157 = vadd.f32 %v1012, %v1156
        %v1158 = vpop.f32.mrb[0].mxu0
        %1159 = vmatprep.mubr.f32.mxu0 0.0
        %1160 = vmatmul.mubr.f32.gmra.mrb[0].mxu0 %v545
        %v1161 = vpop.f32.mrb[0].mxu0
        %v1162 = vadd.f32 %v1017, %v1161
        %v1163 = vpop.f32.mrb[0].mxu0
        %1164 = vmatprep.mubr.f32.mxu0 0.0
        %1165 = vmatmul.mubr.f32.gmra.mrb[0].mxu0 %v548
        %v1166 = vpop.f32.mrb[0].mxu0
        %v1167 = vadd.f32 %v1022, %v1166
        %v1168 = vpop.f32.mrb[0].mxu0
        %1169 = vmatprep.mubr.f32.mxu0 0.0
        %1170 = vmatmul.mubr.f32.gmra.mrb[0].mxu0 %v551
        %v1171 = vpop.f32.mrb[0].mxu0
        %v1172 = vadd.f32 %v1027, %v1171
        %v1173 = vpop.f32.mrb[0].mxu0
        %1174 = vdwg.mxu0
        %v1175 = vmax.f32 %v791, 0.0
        %v1176 = vmax.f32 %v793, 0.0
        %v1177 = vmax.f32 %v1097, 0.0
        %v1178 = vmax.f32 %v797, 0.0
        %v1179 = vmax.f32 %v799, 0.0
        %v1180 = vmax.f32 %v1102, 0.0
        %v1181 = vmax.f32 %v803, 0.0
        %v1182 = vmax.f32 %v805, 0.0
        %v1183 = vmax.f32 %v1107, 0.0
        %v1184 = vmax.f32 %v809, 0.0
        %v1185 = vmax.f32 %v811, 0.0
        %v1186 = vmax.f32 %v1112, 0.0
        %v1187 = vmax.f32 %v815, 0.0
        %v1188 = vmax.f32 %v817, 0.0
        %v1189 = vmax.f32 %v1117, 0.0
        %v1190 = vmax.f32 %v821, 0.0
        %v1191 = vmax.f32 %v823, 0.0
        %v1192 = vmax.f32 %v1122, 0.0
        %v1193 = vmax.f32 %v827, 0.0
        %v1194 = vmax.f32 %v829, 0.0
        %v1195 = vmax.f32 %v1127, 0.0
        %v1196 = vmax.f32 %v833, 0.0
        %v1197 = vmax.f32 %v835, 0.0
        %v1198 = vmax.f32 %v1132, 0.0
        %v1199 = vmax.f32 %v839, 0.0
        %v1200 = vmax.f32 %v841, 0.0
        %v1201 = vmax.f32 %v1137, 0.0
        %v1202 = vmax.f32 %v845, 0.0
        %v1203 = vmax.f32 %v847, 0.0
        %v1204 = vmax.f32 %v1142, 0.0
        %v1205 = vmax.f32 %v851, 0.0
        %v1206 = vmax.f32 %v853, 0.0
        %v1207 = vmax.f32 %v1147, 0.0
        %v1208 = vmax.f32 %v857, 0.0
        %v1209 = vmax.f32 %v859, 0.0
        %v1210 = vmax.f32 %v1152, 0.0
        %v1211 = vmax.f32 %v863, 0.0
        %v1212 = vmax.f32 %v865, 0.0
        %v1213 = vmax.f32 %v1157, 0.0
        %v1214 = vmax.f32 %v869, 0.0
        %v1215 = vmax.f32 %v871, 0.0
        %v1216 = vmax.f32 %v1162, 0.0
        %v1217 = vmax.f32 %v875, 0.0
        %v1218 = vmax.f32 %v877, 0.0
        %v1219 = vmax.f32 %v1167, 0.0
        %v1220 = vmax.f32 %v881, 0.0
        %v1221 = vmax.f32 %v883, 0.0
        %v1222 = vmax.f32 %v1172, 0.0
        %v1223 = vld [vmem:[#allocation2] sm:$0xff]
        %v1224 = vld [vmem:[#allocation2 + $0x8] sm:$0xff]
        %v1225 = vld [vmem:[#allocation2 + $0x10] sm:$0xff]
        %v1226 = vld [vmem:[#allocation2 + $0x18] sm:$0xff]
        %v1227 = vld [vmem:[#allocation2 + $0x20] sm:$0xff]
        %v1228 = vld [vmem:[#allocation2 + $0x28] sm:$0xff]
        %v1229 = vld [vmem:[#allocation2 + $0x30] sm:$0xff]
        %v1230 = vld [vmem:[#allocation2 + $0x38] sm:$0xff]
        %v1231 = vld [vmem:[#allocation2 + $0x40] sm:$0xff]
        %v1232 = vld [vmem:[#allocation2 + $0x48] sm:$0xff]
        %v1233 = vld [vmem:[#allocation2 + $0x50] sm:$0xff]
        %v1234 = vld [vmem:[#allocation2 + $0x58] sm:$0xff]
        %v1235 = vld [vmem:[#allocation2 + $0x60] sm:$0xff]
        %v1236 = vld [vmem:[#allocation2 + $0x68] sm:$0xff]
        %v1237 = vld [vmem:[#allocation2 + $0x70] sm:$0xff]
        %v1238 = vld [vmem:[#allocation2 + $0x78] sm:$0xff]
        %v1239 = vld [vmem:[#allocation2 + $0x80] sm:$0xff]
        %v1240 = vld [vmem:[#allocation2 + $0x88] sm:$0xff]
        %v1241 = vld [vmem:[#allocation2 + $0x90] sm:$0xff]
        %v1242 = vld [vmem:[#allocation2 + $0x98] sm:$0xff]
        %v1243 = vld [vmem:[#allocation2 + $0xa0] sm:$0xff]
        %v1244 = vld [vmem:[#allocation2 + $0xa8] sm:$0xff]
        %v1245 = vld [vmem:[#allocation2 + $0xb0] sm:$0xff]
        %v1246 = vld [vmem:[#allocation2 + $0xb8] sm:$0xff]
        %v1247 = vld [vmem:[#allocation2 + $0xc0] sm:$0xff]
        %v1248 = vld [vmem:[#allocation2 + $0xc8] sm:$0xff]
        %v1249 = vld [vmem:[#allocation2 + $0xd0] sm:$0xff]
        %v1250 = vld [vmem:[#allocation2 + $0xd8] sm:$0xff]
        %v1251 = vld [vmem:[#allocation2 + $0xe0] sm:$0xff]
        %v1252 = vld [vmem:[#allocation2 + $0xe8] sm:$0xff]
        %v1253 = vld [vmem:[#allocation2 + $0xf0] sm:$0xff]
        %v1254 = vld [vmem:[#allocation2 + $0xf8] sm:$0xff]
        %v1255 = vld [vmem:[#allocation2 + $0x100] sm:$0xff]
        %v1256 = vld [vmem:[#allocation2 + $0x108] sm:$0xff]
        %v1257 = vld [vmem:[#allocation2 + $0x110] sm:$0xff]
        %v1258 = vld [vmem:[#allocation2 + $0x118] sm:$0xff]
        %v1259 = vld [vmem:[#allocation2 + $0x120] sm:$0xff]
        %v1260 = vld [vmem:[#allocation2 + $0x128] sm:$0xff]
        %v1261 = vld [vmem:[#allocation2 + $0x130] sm:$0xff]
        %v1262 = vld [vmem:[#allocation2 + $0x138] sm:$0xff]
        %v1263 = vld [vmem:[#allocation2 + $0x140] sm:$0xff]
        %v1264 = vld [vmem:[#allocation2 + $0x148] sm:$0xff]
        %v1265 = vld [vmem:[#allocation2 + $0x150] sm:$0xff]
        %v1266 = vld [vmem:[#allocation2 + $0x158] sm:$0xff]
        %v1267 = vld [vmem:[#allocation2 + $0x160] sm:$0xff]
        %v1268 = vld [vmem:[#allocation2 + $0x168] sm:$0xff]
        %v1269 = vld [vmem:[#allocation2 + $0x170] sm:$0xff]
        %v1270 = vld [vmem:[#allocation2 + $0x178] sm:$0xff]
        %v1271 = vld [vmem:[#allocation2 + $0x180] sm:$0xff]
        %v1272 = vld [vmem:[#allocation2 + $0x188] sm:$0xff]
        %v1273 = vld [vmem:[#allocation2 + $0x190] sm:$0xff]
        %v1274 = vld [vmem:[#allocation2 + $0x198] sm:$0xff]
        %v1275 = vld [vmem:[#allocation2 + $0x1a0] sm:$0xff]
        %v1276 = vld [vmem:[#allocation2 + $0x1a8] sm:$0xff]
        %v1277 = vld [vmem:[#allocation2 + $0x1b0] sm:$0xff]
        %v1278 = vld [vmem:[#allocation2 + $0x1b8] sm:$0xff]
        %v1279 = vld [vmem:[#allocation2 + $0x1c0] sm:$0xff]
        %v1280 = vld [vmem:[#allocation2 + $0x1c8] sm:$0xff]
        %v1281 = vld [vmem:[#allocation2 + $0x1d0] sm:$0xff]
        %v1282 = vld [vmem:[#allocation2 + $0x1d8] sm:$0xff]
        %v1283 = vld [vmem:[#allocation2 + $0x1e0] sm:$0xff]
        %v1284 = vld [vmem:[#allocation2 + $0x1e8] sm:$0xff]
        %v1285 = vld [vmem:[#allocation2 + $0x1f0] sm:$0xff]
        %v1286 = vld [vmem:[#allocation2 + $0x1f8] sm:$0xff]
        %v1287 = vld [vmem:[%s4] sm:$0x3]
        %v1289 = vlaneseq
        %v1290 = vshrl.u32 %v1289, 7
        %v1291 = vsub.s32 0, %v1290
        %v1292 = vrot.slane %v1287, %v1291
        %v1293 = vlaneseq
        %v1294 = vshrl.u32 %v1293, 7
        %v1295 = vsub.s32 1, %v1294
        %v1296 = vrot.slane %v1287, %v1295
        %1299 = vmatprep.subr.mxu0 %v1224
        %1300 = vmatpush1.msra.mxu0 %v1223
        %1301 = vmatprep.subr.mxu0 %v1226
        %1302 = vmatpush1.msra.mxu0 %v1225
        %1303 = vmatprep.subr.mxu0 %v1228
        %1304 = vmatpush1.msra.mxu0 %v1227
        %1305 = vmatprep.subr.mxu0 %v1230
        %1306 = vmatpush1.msra.mxu0 %v1229
        %1307 = vmatprep.subr.mxu0 %v1232
        %1308 = vmatpush1.msra.mxu0 %v1231
        %1309 = vmatprep.subr.mxu0 %v1234
        %1310 = vmatpush1.msra.mxu0 %v1233
        %1311 = vmatprep.subr.mxu0 %v1236
        %1312 = vmatpush1.msra.mxu0 %v1235
        %1313 = vmatprep.subr.mxu0 %v1238
        %1314 = vmatpush1.msra.mxu0 %v1237
        %1315 = vmatprep.subr.mxu0 %v1240
        %1316 = vmatpush1.msra.mxu0 %v1239
        %1317 = vmatprep.subr.mxu0 %v1242
        %1318 = vmatpush1.msra.mxu0 %v1241
        %1319 = vmatprep.subr.mxu0 %v1244
        %1320 = vmatpush1.msra.mxu0 %v1243
        %1321 = vmatprep.subr.mxu0 %v1246
        %1322 = vmatpush1.msra.mxu0 %v1245
        %1323 = vmatprep.subr.mxu0 %v1248
        %1324 = vmatpush1.msra.mxu0 %v1247
        %1325 = vmatprep.subr.mxu0 %v1250
        %1326 = vmatpush1.msra.mxu0 %v1249
        %1327 = vmatprep.subr.mxu0 %v1252
        %1328 = vmatpush1.msra.mxu0 %v1251
        %1329 = vmatprep.subr.mxu0 %v1254
        %1330 = vmatpush1.msra.mxu0 %v1253
        %1331 = vmatprep.subr.mxu0 %v1256
        %1332 = vmatpush1.msra.mxu0 %v1255
        %1333 = vmatprep.subr.mxu0 %v1258
        %1334 = vmatpush1.msra.mxu0 %v1257
        %1335 = vmatprep.subr.mxu0 %v1260
        %1336 = vmatpush1.msra.mxu0 %v1259
        %1337 = vmatprep.subr.mxu0 %v1262
        %1338 = vmatpush1.msra.mxu0 %v1261
        %1339 = vmatprep.subr.mxu0 %v1264
        %1340 = vmatpush1.msra.mxu0 %v1263
        %1341 = vmatprep.subr.mxu0 %v1266
        %1342 = vmatpush1.msra.mxu0 %v1265
        %1343 = vmatprep.subr.mxu0 %v1268
        %1344 = vmatpush1.msra.mxu0 %v1267
        %1345 = vmatprep.subr.mxu0 %v1270
        %1346 = vmatpush1.msra.mxu0 %v1269
        %1347 = vmatprep.subr.mxu0 %v1272
        %1348 = vmatpush1.msra.mxu0 %v1271
        %1349 = vmatprep.subr.mxu0 %v1274
        %1350 = vmatpush1.msra.mxu0 %v1273
        %1351 = vmatprep.subr.mxu0 %v1276
        %1352 = vmatpush1.msra.mxu0 %v1275
        %1353 = vmatprep.subr.mxu0 %v1278
        %1354 = vmatpush1.msra.mxu0 %v1277
        %1355 = vmatprep.subr.mxu0 %v1280
        %1356 = vmatpush1.msra.mxu0 %v1279
        %1357 = vmatprep.subr.mxu0 %v1282
        %1358 = vmatpush1.msra.mxu0 %v1281
        %1359 = vmatprep.subr.mxu0 %v1284
        %1360 = vmatpush1.msra.mxu0 %v1283
        %1361 = vmatprep.subr.mxu0 %v1286
        %1362 = vmatpush1.msra.mxu0 %v1285
        %1363 = vmatprep.mubr.f32.mxu0 %v1177
        %1364 = vmatmul.mubr.f32.gmra.mrb[0].mxu0 %v1176
        %v1365 = vpop.f32.mrb[0].mxu0
        %v1366 = vadd.f32 %v1292, %v1365
        %v1367 = vpop.f32.mrb[0].mxu0
        %v1368 = vadd.f32 %v1296, %v1367
        %1369 = vmatprep.mubr.f32.mxu0 %v1180
        %1370 = vmatmul.mubr.f32.gmra.mrb[0].mxu0 %v1179
        %v1371 = vpop.f32.mrb[0].mxu0
        %v1372 = vadd.f32 %v1292, %v1371
        %v1373 = vpop.f32.mrb[0].mxu0
        %v1374 = vadd.f32 %v1296, %v1373
        %1375 = vmatprep.mubr.f32.mxu0 %v1183
        %1376 = vmatmul.mubr.f32.gmra.mrb[0].mxu0 %v1182
        %v1377 = vpop.f32.mrb[0].mxu0
        %v1378 = vadd.f32 %v1292, %v1377
        %v1379 = vpop.f32.mrb[0].mxu0
        %v1380 = vadd.f32 %v1296, %v1379
        %1381 = vmatprep.mubr.f32.mxu0 %v1186
        %1382 = vmatmul.mubr.f32.gmra.mrb[0].mxu0 %v1185
        %v1383 = vpop.f32.mrb[0].mxu0
        %v1384 = vadd.f32 %v1292, %v1383
        %v1385 = vpop.f32.mrb[0].mxu0
        %v1386 = vadd.f32 %v1296, %v1385
        %1387 = vmatprep.mubr.f32.mxu0 %v1189
        %1388 = vmatmul.mubr.f32.gmra.mrb[0].mxu0 %v1188
        %v1389 = vpop.f32.mrb[0].mxu0
        %v1390 = vadd.f32 %v1292, %v1389
        %v1391 = vpop.f32.mrb[0].mxu0
        %v1392 = vadd.f32 %v1296, %v1391
        %1393 = vmatprep.mubr.f32.mxu0 %v1192
        %1394 = vmatmul.mubr.f32.gmra.mrb[0].mxu0 %v1191
        %v1395 = vpop.f32.mrb[0].mxu0
        %v1396 = vadd.f32 %v1292, %v1395
        %v1397 = vpop.f32.mrb[0].mxu0
        %v1398 = vadd.f32 %v1296, %v1397
        %1399 = vmatprep.mubr.f32.mxu0 %v1195
        %1400 = vmatmul.mubr.f32.gmra.mrb[0].mxu0 %v1194
        %v1401 = vpop.f32.mrb[0].mxu0
        %v1402 = vadd.f32 %v1292, %v1401
        %v1403 = vpop.f32.mrb[0].mxu0
        %v1404 = vadd.f32 %v1296, %v1403
        %1405 = vmatprep.mubr.f32.mxu0 %v1198
        %1406 = vmatmul.mubr.f32.gmra.mrb[0].mxu0 %v1197
        %v1407 = vpop.f32.mrb[0].mxu0
        %v1408 = vadd.f32 %v1292, %v1407
        %v1409 = vpop.f32.mrb[0].mxu0
        %v1410 = vadd.f32 %v1296, %v1409
        %1411 = vmatprep.mubr.f32.mxu0 %v1201
        %1412 = vmatmul.mubr.f32.gmra.mrb[0].mxu0 %v1200
        %v1413 = vpop.f32.mrb[0].mxu0
        %v1414 = vadd.f32 %v1292, %v1413
        %v1415 = vpop.f32.mrb[0].mxu0
        %v1416 = vadd.f32 %v1296, %v1415
        %1417 = vmatprep.mubr.f32.mxu0 %v1204
        %1418 = vmatmul.mubr.f32.gmra.mrb[0].mxu0 %v1203
        %v1419 = vpop.f32.mrb[0].mxu0
        %v1420 = vadd.f32 %v1292, %v1419
        %v1421 = vpop.f32.mrb[0].mxu0
        %v1422 = vadd.f32 %v1296, %v1421
        %1423 = vmatprep.mubr.f32.mxu0 %v1207
        %1424 = vmatmul.mubr.f32.gmra.mrb[0].mxu0 %v1206
        %v1425 = vpop.f32.mrb[0].mxu0
        %v1426 = vadd.f32 %v1292, %v1425
        %v1427 = vpop.f32.mrb[0].mxu0
        %v1428 = vadd.f32 %v1296, %v1427
        %1429 = vmatprep.mubr.f32.mxu0 %v1210
        %1430 = vmatmul.mubr.f32.gmra.mrb[0].mxu0 %v1209
        %v1431 = vpop.f32.mrb[0].mxu0
        %v1432 = vadd.f32 %v1292, %v1431
        %v1433 = vpop.f32.mrb[0].mxu0
        %v1434 = vadd.f32 %v1296, %v1433
        %1435 = vmatprep.mubr.f32.mxu0 %v1213
        %1436 = vmatmul.mubr.f32.gmra.mrb[0].mxu0 %v1212
        %v1437 = vpop.f32.mrb[0].mxu0
        %v1438 = vadd.f32 %v1292, %v1437
        %v1439 = vpop.f32.mrb[0].mxu0
        %v1440 = vadd.f32 %v1296, %v1439
        %1441 = vmatprep.mubr.f32.mxu0 %v1216
        %1442 = vmatmul.mubr.f32.gmra.mrb[0].mxu0 %v1215
        %v1443 = vpop.f32.mrb[0].mxu0
        %v1444 = vadd.f32 %v1292, %v1443
        %v1445 = vpop.f32.mrb[0].mxu0
        %v1446 = vadd.f32 %v1296, %v1445
        %1447 = vmatprep.mubr.f32.mxu0 %v1219
        %1448 = vmatmul.mubr.f32.gmra.mrb[0].mxu0 %v1218
        %v1449 = vpop.f32.mrb[0].mxu0
        %v1450 = vadd.f32 %v1292, %v1449
        %v1451 = vpop.f32.mrb[0].mxu0
        %v1452 = vadd.f32 %v1296, %v1451
        %1453 = vmatprep.mubr.f32.mxu0 %v1222
        %1454 = vmatmul.mubr.f32.gmra.mrb[0].mxu0 %v1221
        %v1455 = vpop.f32.mrb[0].mxu0
        %v1456 = vadd.f32 %v1292, %v1455
        %v1457 = vpop.f32.mrb[0].mxu0
        %v1458 = vadd.f32 %v1296, %v1457
        %1459 = vdwg.mxu0
        %v1460 = vmax.f32 %v1366, 0.0
        %v1461 = vmax.f32 %v1368, 0.0
        %v1462 = vmax.f32 %v1372, 0.0
        %v1463 = vmax.f32 %v1374, 0.0
        %v1464 = vmax.f32 %v1378, 0.0
        %v1465 = vmax.f32 %v1380, 0.0
        %v1466 = vmax.f32 %v1384, 0.0
        %v1467 = vmax.f32 %v1386, 0.0
        %v1468 = vmax.f32 %v1390, 0.0
        %v1469 = vmax.f32 %v1392, 0.0
        %v1470 = vmax.f32 %v1396, 0.0
        %v1471 = vmax.f32 %v1398, 0.0
        %v1472 = vmax.f32 %v1402, 0.0
        %v1473 = vmax.f32 %v1404, 0.0
        %v1474 = vmax.f32 %v1408, 0.0
        %v1475 = vmax.f32 %v1410, 0.0
        %v1476 = vmax.f32 %v1414, 0.0
        %v1477 = vmax.f32 %v1416, 0.0
        %v1478 = vmax.f32 %v1420, 0.0
        %v1479 = vmax.f32 %v1422, 0.0
        %v1480 = vmax.f32 %v1426, 0.0
        %v1481 = vmax.f32 %v1428, 0.0
        %v1482 = vmax.f32 %v1432, 0.0
        %v1483 = vmax.f32 %v1434, 0.0
        %v1484 = vmax.f32 %v1438, 0.0
        %v1485 = vmax.f32 %v1440, 0.0
        %v1486 = vmax.f32 %v1444, 0.0
        %v1487 = vmax.f32 %v1446, 0.0
        %v1488 = vmax.f32 %v1450, 0.0
        %v1489 = vmax.f32 %v1452, 0.0
        %v1490 = vmax.f32 %v1456, 0.0
        %v1491 = vmax.f32 %v1458, 0.0
        %v1492 = vld [vmem:[%s5] sm:$0xff]
        %v1493 = vld [vmem:[%s5 + $0x8] sm:$0xff]
        %v1494 = vld [vmem:[%s5 + $0x10] sm:$0xff]
        %v1495 = vld [vmem:[%s5 + $0x18] sm:$0xff]
        %v1496 = vld [vmem:[%s5 + $0x20] sm:$0xff]
        %v1497 = vld [vmem:[%s5 + $0x28] sm:$0xff]
        %v1498 = vld [vmem:[%s5 + $0x30] sm:$0xff]
        %v1499 = vld [vmem:[%s5 + $0x38] sm:$0xff]
        %v1500 = vld [vmem:[%s5 + $0x40] sm:$0xff]
        %v1501 = vld [vmem:[%s5 + $0x48] sm:$0xff]
        %v1502 = vld [vmem:[%s5 + $0x50] sm:$0xff]
        %v1503 = vld [vmem:[%s5 + $0x58] sm:$0xff]
        %v1504 = vld [vmem:[%s5 + $0x60] sm:$0xff]
        %v1505 = vld [vmem:[%s5 + $0x68] sm:$0xff]
        %v1506 = vld [vmem:[%s5 + $0x70] sm:$0xff]
        %v1507 = vld [vmem:[%s5 + $0x78] sm:$0xff]
        %v1508 = vld [vmem:[%s6] sm:$0xff]
        %v1509 = vld [vmem:[%s6 + $0x8] sm:$0xff]
        %v1510 = vld [vmem:[%s6 + $0x10] sm:$0xff]
        %v1511 = vld [vmem:[%s6 + $0x18] sm:$0xff]
        %v1512 = vld [vmem:[%s6 + $0x20] sm:$0xff]
        %v1513 = vld [vmem:[%s6 + $0x28] sm:$0xff]
        %v1514 = vld [vmem:[%s6 + $0x30] sm:$0xff]
        %v1515 = vld [vmem:[%s6 + $0x38] sm:$0xff]
        %v1516 = vld [vmem:[%s6 + $0x40] sm:$0xff]
        %v1517 = vld [vmem:[%s6 + $0x48] sm:$0xff]
        %v1518 = vld [vmem:[%s6 + $0x50] sm:$0xff]
        %v1519 = vld [vmem:[%s6 + $0x58] sm:$0xff]
        %v1520 = vld [vmem:[%s6 + $0x60] sm:$0xff]
        %v1521 = vld [vmem:[%s6 + $0x68] sm:$0xff]
        %v1522 = vld [vmem:[%s6 + $0x70] sm:$0xff]
        %v1523 = vld [vmem:[%s6 + $0x78] sm:$0xff]
        %v1524 = vld [vmem:[%s6 + $0x80] sm:$0xff]
        %v1525 = vld [vmem:[%s6 + $0x88] sm:$0xff]
        %v1526 = vld [vmem:[%s6 + $0x90] sm:$0xff]
        %v1527 = vld [vmem:[%s6 + $0x98] sm:$0xff]
        %v1528 = vld [vmem:[%s6 + $0xa0] sm:$0xff]
        %v1529 = vld [vmem:[%s6 + $0xa8] sm:$0xff]
        %v1530 = vld [vmem:[%s6 + $0xb0] sm:$0xff]
        %v1531 = vld [vmem:[%s6 + $0xb8] sm:$0xff]
        %v1532 = vld [vmem:[%s6 + $0xc0] sm:$0xff]
        %v1533 = vld [vmem:[%s6 + $0xc8] sm:$0xff]
        %v1534 = vld [vmem:[%s6 + $0xd0] sm:$0xff]
        %v1535 = vld [vmem:[%s6 + $0xd8] sm:$0xff]
        %v1536 = vld [vmem:[%s6 + $0xe0] sm:$0xff]
        %v1537 = vld [vmem:[%s6 + $0xe8] sm:$0xff]
        %v1538 = vld [vmem:[%s6 + $0xf0] sm:$0xff]
        %v1539 = vld [vmem:[%s6 + $0xf8] sm:$0xff]
        %v1540 = vld [vmem:[%s7] sm:$0x1]
        %1541 = vmatprep.subr.mxu0 0.0
        %1542 = vmatpush1.msra.mxu0 %v1508
        %1543 = vmatprep.subr.mxu0 0.0
        %1544 = vmatpush1.msra.mxu0 %v1509
        %1545 = vmatprep.subr.mxu0 0.0
        %1546 = vmatpush1.msra.mxu0 %v1510
        %1547 = vmatprep.subr.mxu0 0.0
        %1548 = vmatpush1.msra.mxu0 %v1511
        %1549 = vmatprep.subr.mxu0 0.0
        %1550 = vmatpush1.msra.mxu0 %v1512
        %1551 = vmatprep.subr.mxu0 0.0
        %1552 = vmatpush1.msra.mxu0 %v1513
        %1553 = vmatprep.subr.mxu0 0.0
        %1554 = vmatpush1.msra.mxu0 %v1514
        %1555 = vmatprep.subr.mxu0 0.0
        %1556 = vmatpush1.msra.mxu0 %v1515
        %1557 = vmatprep.subr.mxu0 0.0
        %1558 = vmatpush1.msra.mxu0 %v1516
        %1559 = vmatprep.subr.mxu0 0.0
        %1560 = vmatpush1.msra.mxu0 %v1517
        %1561 = vmatprep.subr.mxu0 0.0
        %1562 = vmatpush1.msra.mxu0 %v1518
        %1563 = vmatprep.subr.mxu0 0.0
        %1564 = vmatpush1.msra.mxu0 %v1519
        %1565 = vmatprep.subr.mxu0 0.0
        %1566 = vmatpush1.msra.mxu0 %v1520
        %1567 = vmatprep.subr.mxu0 0.0
        %1568 = vmatpush1.msra.mxu0 %v1521
        %1569 = vmatprep.subr.mxu0 0.0
        %1570 = vmatpush1.msra.mxu0 %v1522
        %1571 = vmatprep.subr.mxu0 0.0
        %1572 = vmatpush1.msra.mxu0 %v1523
        %1573 = vmatprep.subr.mxu0 0.0
        %1574 = vmatpush1.msra.mxu0 %v1524
        %1575 = vmatprep.subr.mxu0 0.0
        %1576 = vmatpush1.msra.mxu0 %v1525
        %1577 = vmatprep.subr.mxu0 0.0
        %1578 = vmatpush1.msra.mxu0 %v1526
        %1579 = vmatprep.subr.mxu0 0.0
        %1580 = vmatpush1.msra.mxu0 %v1527
        %1581 = vmatprep.subr.mxu0 0.0
        %1582 = vmatpush1.msra.mxu0 %v1528
        %1583 = vmatprep.subr.mxu0 0.0
        %1584 = vmatpush1.msra.mxu0 %v1529
        %1585 = vmatprep.subr.mxu0 0.0
        %1586 = vmatpush1.msra.mxu0 %v1530
        %1587 = vmatprep.subr.mxu0 0.0
        %1588 = vmatpush1.msra.mxu0 %v1531
        %1589 = vmatprep.subr.mxu0 0.0
        %1590 = vmatpush1.msra.mxu0 %v1532
        %1591 = vmatprep.subr.mxu0 0.0
        %1592 = vmatpush1.msra.mxu0 %v1533
        %1593 = vmatprep.subr.mxu0 0.0
        %1594 = vmatpush1.msra.mxu0 %v1534
        %1595 = vmatprep.subr.mxu0 0.0
        %1596 = vmatpush1.msra.mxu0 %v1535
        %1597 = vmatprep.subr.mxu0 0.0
        %1598 = vmatpush1.msra.mxu0 %v1536
        %1599 = vmatprep.subr.mxu0 0.0
        %1600 = vmatpush1.msra.mxu0 %v1537
        %1601 = vmatprep.subr.mxu0 0.0
        %1602 = vmatpush1.msra.mxu0 %v1538
        %1603 = vmatprep.subr.mxu0 0.0
        %1604 = vmatpush1.msra.mxu0 %v1539
        %1605 = vmatprep.mubr.f32.mxu0 %v1461
        %1606 = vmatmul.mubr.f32.gmra.mrb[0].mxu0 %v1460
        %v1607 = vpop.f32.mrb[0].mxu0
        %v1608 = vadd.f32 0.0, %v1607
        %v1609 = vpop.f32.mrb[0].mxu0
        %1610 = vmatprep.mubr.f32.mxu0 %v1463
        %1611 = vmatmul.mubr.f32.gmra.mrb[0].mxu0 %v1462
        %v1612 = vpop.f32.mrb[0].mxu0
        %v1613 = vadd.f32 0.0, %v1612
        %v1614 = vpop.f32.mrb[0].mxu0
        %1615 = vmatprep.mubr.f32.mxu0 %v1465
        %1616 = vmatmul.mubr.f32.gmra.mrb[0].mxu0 %v1464
        %v1617 = vpop.f32.mrb[0].mxu0
        %v1618 = vadd.f32 0.0, %v1617
        %v1619 = vpop.f32.mrb[0].mxu0
        %1620 = vmatprep.mubr.f32.mxu0 %v1467
        %1621 = vmatmul.mubr.f32.gmra.mrb[0].mxu0 %v1466
        %v1622 = vpop.f32.mrb[0].mxu0
        %v1623 = vadd.f32 0.0, %v1622
        %v1624 = vpop.f32.mrb[0].mxu0
        %1625 = vmatprep.mubr.f32.mxu0 %v1469
        %1626 = vmatmul.mubr.f32.gmra.mrb[0].mxu0 %v1468
        %v1627 = vpop.f32.mrb[0].mxu0
        %v1628 = vadd.f32 0.0, %v1627
        %v1629 = vpop.f32.mrb[0].mxu0
        %1630 = vmatprep.mubr.f32.mxu0 %v1471
        %1631 = vmatmul.mubr.f32.gmra.mrb[0].mxu0 %v1470
        %v1632 = vpop.f32.mrb[0].mxu0
        %v1633 = vadd.f32 0.0, %v1632
        %v1634 = vpop.f32.mrb[0].mxu0
        %1635 = vmatprep.mubr.f32.mxu0 %v1473
        %1636 = vmatmul.mubr.f32.gmra.mrb[0].mxu0 %v1472
        %v1637 = vpop.f32.mrb[0].mxu0
        %v1638 = vadd.f32 0.0, %v1637
        %v1639 = vpop.f32.mrb[0].mxu0
        %1640 = vmatprep.mubr.f32.mxu0 %v1475
        %1641 = vmatmul.mubr.f32.gmra.mrb[0].mxu0 %v1474
        %v1642 = vpop.f32.mrb[0].mxu0
        %v1643 = vadd.f32 0.0, %v1642
        %v1644 = vpop.f32.mrb[0].mxu0
        %1645 = vmatprep.mubr.f32.mxu0 %v1477
        %1646 = vmatmul.mubr.f32.gmra.mrb[0].mxu0 %v1476
        %v1647 = vpop.f32.mrb[0].mxu0
        %v1648 = vadd.f32 0.0, %v1647
        %v1649 = vpop.f32.mrb[0].mxu0
        %1650 = vmatprep.mubr.f32.mxu0 %v1479
        %1651 = vmatmul.mubr.f32.gmra.mrb[0].mxu0 %v1478
        %v1652 = vpop.f32.mrb[0].mxu0
        %v1653 = vadd.f32 0.0, %v1652
        %v1654 = vpop.f32.mrb[0].mxu0
        %1655 = vmatprep.mubr.f32.mxu0 %v1481
        %1656 = vmatmul.mubr.f32.gmra.mrb[0].mxu0 %v1480
        %v1657 = vpop.f32.mrb[0].mxu0
        %v1658 = vadd.f32 0.0, %v1657
        %v1659 = vpop.f32.mrb[0].mxu0
        %1660 = vmatprep.mubr.f32.mxu0 %v1483
        %1661 = vmatmul.mubr.f32.gmra.mrb[0].mxu0 %v1482
        %v1662 = vpop.f32.mrb[0].mxu0
        %v1663 = vadd.f32 0.0, %v1662
        %v1664 = vpop.f32.mrb[0].mxu0
        %1665 = vmatprep.mubr.f32.mxu0 %v1485
        %1666 = vmatmul.mubr.f32.gmra.mrb[0].mxu0 %v1484
        %v1667 = vpop.f32.mrb[0].mxu0
        %v1668 = vadd.f32 0.0, %v1667
        %v1669 = vpop.f32.mrb[0].mxu0
        %1670 = vmatprep.mubr.f32.mxu0 %v1487
        %1671 = vmatmul.mubr.f32.gmra.mrb[0].mxu0 %v1486
        %v1672 = vpop.f32.mrb[0].mxu0
        %v1673 = vadd.f32 0.0, %v1672
        %v1674 = vpop.f32.mrb[0].mxu0
        %1675 = vmatprep.mubr.f32.mxu0 %v1489
        %1676 = vmatmul.mubr.f32.gmra.mrb[0].mxu0 %v1488
        %v1677 = vpop.f32.mrb[0].mxu0
        %v1678 = vadd.f32 0.0, %v1677
        %v1679 = vpop.f32.mrb[0].mxu0
        %1680 = vmatprep.mubr.f32.mxu0 %v1491
        %1681 = vmatmul.mubr.f32.gmra.mrb[0].mxu0 %v1490
        %v1682 = vpop.f32.mrb[0].mxu0
        %v1683 = vadd.f32 0.0, %v1682
        %v1684 = vpop.f32.mrb[0].mxu0
        %1685 = vdwg.mxu0
        %1686 = vmatprep.subr.mxu0 0.0
        %1687 = vmatpush1.msra.mxu0 %v1492
        %1688 = vmatprep.subr.mxu0 0.0
        %1689 = vmatpush1.msra.mxu0 %v1493
        %1690 = vmatprep.subr.mxu0 0.0
        %1691 = vmatpush1.msra.mxu0 %v1494
        %1692 = vmatprep.subr.mxu0 0.0
        %1693 = vmatpush1.msra.mxu0 %v1495
        %1694 = vmatprep.subr.mxu0 0.0
        %1695 = vmatpush1.msra.mxu0 %v1496
        %1696 = vmatprep.subr.mxu0 0.0
        %1697 = vmatpush1.msra.mxu0 %v1497
        %1698 = vmatprep.subr.mxu0 0.0
        %1699 = vmatpush1.msra.mxu0 %v1498
        %1700 = vmatprep.subr.mxu0 0.0
        %1701 = vmatpush1.msra.mxu0 %v1499
        %1702 = vmatprep.subr.mxu0 0.0
        %1703 = vmatpush1.msra.mxu0 %v1500
        %1704 = vmatprep.subr.mxu0 0.0
        %1705 = vmatpush1.msra.mxu0 %v1501
        %1706 = vmatprep.subr.mxu0 0.0
        %1707 = vmatpush1.msra.mxu0 %v1502
        %1708 = vmatprep.subr.mxu0 0.0
        %1709 = vmatpush1.msra.mxu0 %v1503
        %1710 = vmatprep.subr.mxu0 0.0
        %1711 = vmatpush1.msra.mxu0 %v1504
        %1712 = vmatprep.subr.mxu0 0.0
        %1713 = vmatpush1.msra.mxu0 %v1505
        %1714 = vmatprep.subr.mxu0 0.0
        %1715 = vmatpush1.msra.mxu0 %v1506
        %1716 = vmatprep.subr.mxu0 0.0
        %1717 = vmatpush1.msra.mxu0 %v1507
        %1718 = vmatprep.subr.mxu0 0.0
        %1719 = vmatpush1.msra.mxu0 0.0
        %1720 = vmatprep.subr.mxu0 0.0
        %1721 = vmatpush1.msra.mxu0 0.0
        %1722 = vmatprep.subr.mxu0 0.0
        %1723 = vmatpush1.msra.mxu0 0.0
        %1724 = vmatprep.subr.mxu0 0.0
        %1725 = vmatpush1.msra.mxu0 0.0
        %1726 = vmatprep.subr.mxu0 0.0
        %1727 = vmatpush1.msra.mxu0 0.0
        %1728 = vmatprep.subr.mxu0 0.0
        %1729 = vmatpush1.msra.mxu0 0.0
        %1730 = vmatprep.subr.mxu0 0.0
        %1731 = vmatpush1.msra.mxu0 0.0
        %1732 = vmatprep.subr.mxu0 0.0
        %1733 = vmatpush1.msra.mxu0 0.0
        %1734 = vmatprep.subr.mxu0 0.0
        %1735 = vmatpush1.msra.mxu0 0.0
        %1736 = vmatprep.subr.mxu0 0.0
        %1737 = vmatpush1.msra.mxu0 0.0
        %1738 = vmatprep.subr.mxu0 0.0
        %1739 = vmatpush1.msra.mxu0 0.0
        %1740 = vmatprep.subr.mxu0 0.0
        %1741 = vmatpush1.msra.mxu0 0.0
        %1742 = vmatprep.subr.mxu0 0.0
        %1743 = vmatpush1.msra.mxu0 0.0
        %1744 = vmatprep.subr.mxu0 0.0
        %1745 = vmatpush1.msra.mxu0 0.0
        %1746 = vmatprep.subr.mxu0 0.0
        %1747 = vmatpush1.msra.mxu0 0.0
        %1748 = vmatprep.subr.mxu0 0.0
        %1749 = vmatpush1.msra.mxu0 0.0
        %1750 = vmatprep.mubr.f32.mxu0 0.0
        %1751 = vmatmul.mubr.f32.gmra.mrb[0].mxu0 %v1175
        %v1752 = vpop.f32.mrb[0].mxu0
        %v1753 = vadd.f32 %v1608, %v1752
        %v1754 = vpop.f32.mrb[0].mxu0
        %1755 = vmatprep.mubr.f32.mxu0 0.0
        %1756 = vmatmul.mubr.f32.gmra.mrb[0].mxu0 %v1178
        %v1757 = vpop.f32.mrb[0].mxu0
        %v1758 = vadd.f32 %v1613, %v1757
        %v1759 = vpop.f32.mrb[0].mxu0
        %1760 = vmatprep.mubr.f32.mxu0 0.0
        %1761 = vmatmul.mubr.f32.gmra.mrb[0].mxu0 %v1181
        %v1762 = vpop.f32.mrb[0].mxu0
        %v1763 = vadd.f32 %v1618, %v1762
        %v1764 = vpop.f32.mrb[0].mxu0
        %1765 = vmatprep.mubr.f32.mxu0 0.0
        %1766 = vmatmul.mubr.f32.gmra.mrb[0].mxu0 %v1184
        %v1767 = vpop.f32.mrb[0].mxu0
        %v1768 = vadd.f32 %v1623, %v1767
        %v1769 = vpop.f32.mrb[0].mxu0
        %1770 = vmatprep.mubr.f32.mxu0 0.0
        %1771 = vmatmul.mubr.f32.gmra.mrb[0].mxu0 %v1187
        %v1772 = vpop.f32.mrb[0].mxu0
        %v1773 = vadd.f32 %v1628, %v1772
        %v1774 = vpop.f32.mrb[0].mxu0
        %1775 = vmatprep.mubr.f32.mxu0 0.0
        %1776 = vmatmul.mubr.f32.gmra.mrb[0].mxu0 %v1190
        %v1777 = vpop.f32.mrb[0].mxu0
        %v1778 = vadd.f32 %v1633, %v1777
        %v1779 = vpop.f32.mrb[0].mxu0
        %1780 = vmatprep.mubr.f32.mxu0 0.0
        %1781 = vmatmul.mubr.f32.gmra.mrb[0].mxu0 %v1193
        %v1782 = vpop.f32.mrb[0].mxu0
        %v1783 = vadd.f32 %v1638, %v1782
        %v1784 = vpop.f32.mrb[0].mxu0
        %1785 = vmatprep.mubr.f32.mxu0 0.0
        %1786 = vmatmul.mubr.f32.gmra.mrb[0].mxu0 %v1196
        %v1787 = vpop.f32.mrb[0].mxu0
        %v1788 = vadd.f32 %v1643, %v1787
        %v1789 = vpop.f32.mrb[0].mxu0
        %1790 = vmatprep.mubr.f32.mxu0 0.0
        %1791 = vmatmul.mubr.f32.gmra.mrb[0].mxu0 %v1199
        %v1792 = vpop.f32.mrb[0].mxu0
        %v1793 = vadd.f32 %v1648, %v1792
        %v1794 = vpop.f32.mrb[0].mxu0
        %1795 = vmatprep.mubr.f32.mxu0 0.0
        %1796 = vmatmul.mubr.f32.gmra.mrb[0].mxu0 %v1202
        %v1797 = vpop.f32.mrb[0].mxu0
        %v1798 = vadd.f32 %v1653, %v1797
        %v1799 = vpop.f32.mrb[0].mxu0
        %1800 = vmatprep.mubr.f32.mxu0 0.0
        %1801 = vmatmul.mubr.f32.gmra.mrb[0].mxu0 %v1205
        %v1802 = vpop.f32.mrb[0].mxu0
        %v1803 = vadd.f32 %v1658, %v1802
        %v1804 = vpop.f32.mrb[0].mxu0
        %1805 = vmatprep.mubr.f32.mxu0 0.0
        %1806 = vmatmul.mubr.f32.gmra.mrb[0].mxu0 %v1208
        %v1807 = vpop.f32.mrb[0].mxu0
        %v1808 = vadd.f32 %v1663, %v1807
        %v1809 = vpop.f32.mrb[0].mxu0
        %1810 = vmatprep.mubr.f32.mxu0 0.0
        %1811 = vmatmul.mubr.f32.gmra.mrb[0].mxu0 %v1211
        %v1812 = vpop.f32.mrb[0].mxu0
        %v1813 = vadd.f32 %v1668, %v1812
        %v1814 = vpop.f32.mrb[0].mxu0
        %1815 = vmatprep.mubr.f32.mxu0 0.0
        %1816 = vmatmul.mubr.f32.gmra.mrb[0].mxu0 %v1214
        %v1817 = vpop.f32.mrb[0].mxu0
        %v1818 = vadd.f32 %v1673, %v1817
        %v1819 = vpop.f32.mrb[0].mxu0
        %1820 = vmatprep.mubr.f32.mxu0 0.0
        %1821 = vmatmul.mubr.f32.gmra.mrb[0].mxu0 %v1217
        %v1822 = vpop.f32.mrb[0].mxu0
        %v1823 = vadd.f32 %v1678, %v1822
        %v1824 = vpop.f32.mrb[0].mxu0
        %1825 = vmatprep.mubr.f32.mxu0 0.0
        %1826 = vmatmul.mubr.f32.gmra.mrb[0].mxu0 %v1220
        %v1827 = vpop.f32.mrb[0].mxu0
        %v1828 = vadd.f32 %v1683, %v1827
        %v1829 = vpop.f32.mrb[0].mxu0
        %1830 = vdwg.mxu0
        %v1832 = vlaneseq
        %v1833 = vshrl.u32 %v1832, 7
        %v1834 = vsub.s32 0, %v1833
        %v1835 = vrot.slane %v1540, %v1834
        %v1837 = vadd.f32 %v1753, %v1835
        %v1838 = vadd.f32 %v1758, %v1835
        %v1839 = vadd.f32 %v1763, %v1835
        %v1840 = vadd.f32 %v1768, %v1835
        %v1841 = vadd.f32 %v1773, %v1835
        %v1842 = vadd.f32 %v1778, %v1835
        %v1843 = vadd.f32 %v1783, %v1835
        %v1844 = vadd.f32 %v1788, %v1835
        %v1845 = vadd.f32 %v1793, %v1835
        %v1846 = vadd.f32 %v1798, %v1835
        %v1847 = vadd.f32 %v1803, %v1835
        %v1848 = vadd.f32 %v1808, %v1835
        %v1849 = vadd.f32 %v1813, %v1835
        %v1850 = vadd.f32 %v1818, %v1835
        %v1851 = vadd.f32 %v1823, %v1835
        %v1852 = vadd.f32 %v1828, %v1835
        %1853 = vst [vmem:[%s316] sm:$0xff] %v1837
        %1854 = vst [vmem:[%s316 + $0x8] sm:$0xff] %v1838
        %1855 = vst [vmem:[%s316 + $0x10] sm:$0xff] %v1839
        %1856 = vst [vmem:[%s316 + $0x18] sm:$0xff] %v1840
        %1857 = vst [vmem:[%s316 + $0x20] sm:$0xff] %v1841
        %1858 = vst [vmem:[%s316 + $0x28] sm:$0xff] %v1842
        %1859 = vst [vmem:[%s316 + $0x30] sm:$0xff] %v1843
        %1860 = vst [vmem:[%s316 + $0x38] sm:$0xff] %v1844
        %1861 = vst [vmem:[%s316 + $0x40] sm:$0xff] %v1845
        %1862 = vst [vmem:[%s316 + $0x48] sm:$0xff] %v1846
        %1863 = vst [vmem:[%s316 + $0x50] sm:$0xff] %v1847
        %1864 = vst [vmem:[%s316 + $0x58] sm:$0xff] %v1848
        %1865 = vst [vmem:[%s316 + $0x60] sm:$0xff] %v1849
        %1866 = vst [vmem:[%s316 + $0x68] sm:$0xff] %v1850
        %1867 = vst [vmem:[%s316 + $0x70] sm:$0xff] %v1851
        %1868 = vst [vmem:[%s316 + $0x78] sm:$0xff] %v1852
        %s1869 = sand.u32 %s204, 1
        %s1870 = scalar_lea.sflag [#allocation4], %s1869
        %s1871 = sand.u32 %s204, 1
        %s1872 = smul.addr %s1871, 128
        %s1873 = scalar_lea.vmem [#allocation5], %s1872
        // Predicated region
        $region57: #{tpu_custom_call.1} parent=51 // pred_check
          %p1874 = pneg %p214
        $region58: #{tpu_custom_call.1} parent=51 // pred_check_branch
          %1876 = sbr.rel (%p1874) target = $region60
        $region59: #{tpu_custom_call.1} parent=51 // pred_region
          %s1877 = smul.u32 16, %s23
          %s1879 = ssub.s32 2048, 2048
          %1880 = vsyncadd %s1870, %s1879
          %s1881 = smul.addr %s1877, 128
          %s1882 = scalar_lea.hbm %s8, %s1881
          %s1883 = sshll.u32 %s1873, 4
          %s1884 = int_to_ptr.vmem [resolvable:$true] %s1883
          %1889 = dma.vmem_to_hbm [thread:$0]  %s1884, 2048, %s1882, %s1870, 128, 128, 8
        $region60: #{tpu_custom_call.1} parent=51 // pred_fallthru
          _
      $region52: #{tpu_custom_call.1} parent=5 // pred_fallthru
        _
      %p1890 = scmp.le.s32.totalorder 2, %s18
      // Predicated region
      $region61: #{tpu_custom_call.1} parent=5 // pred_check
        %p1891 = pneg %p1890
      $region62: #{tpu_custom_call.1} parent=5 // pred_check_branch
        %1893 = sbr.rel (%p1891) target = $region64
      $region63: #{tpu_custom_call.1} parent=5 // pred_region
        %s1894 = ssub.s32 %s18, 2
        // Predicated region
        $region65: #{tpu_custom_call.1} parent=63 // pred_check
          %p1895 = pneg %p220
        $region66: #{tpu_custom_call.1} parent=63 // pred_check_branch
          %1897 = sbr.rel (%p1895) target = $region68
        $region67: #{tpu_custom_call.1} parent=63 // pred_region
          %s1898 = sand.u32 %s205, 1
          %s1899 = scalar_lea.sflag [#allocation4], %s1898
          %s1900 = sand.u32 %s205, 1
          %s1901 = smul.addr %s1900, 128
          %s1902 = scalar_lea.vmem [#allocation5], %s1901
          %1903 = dma.done %s1899, 2048
        $region68: #{tpu_custom_call.1} parent=63 // pred_fallthru
          _
      $region64: #{tpu_custom_call.1} parent=5 // pred_fallthru
        _
    $region6: #{tpu_custom_call.1} parent=1 // loop_footer
      %s22 = sadd.s32 1, %s18
    $region7: #{tpu_custom_call.1} parent=1 // loop_footer_branch
      %17 = sbr.rel target = $region3
    $region8: #{tpu_custom_call.1} parent=1 // loop_exit
      _
    %1904 = vsyncpa [#allocation3], 1
    %s1905 = scalar_lea.sflag [#allocation3], 1
    %1906 = vsyncpa %s1905, 1
    %1907 = vsyncpa [#allocation4], 1
    %s1908 = scalar_lea.sflag [#allocation4], 1
    %1909 = vsyncpa %s1908, 1

</llo_original>
